<compile_context>
chip_gen: v7x
topology: tpu7x:2x2x1
jax: 0.10.0
libtpu: 0.0.40
codegen_flags: <defaults>
</compile_context>

<pallas_src>
import functools

import jax
import jax.numpy as jnp
from jax import lax
from jax.experimental import pallas as pl
from jax.experimental.pallas import tpu as pltpu


# 32 MiB scoped VMEM: raises v5e's 16 MiB default, stays within v6e/v7x defaults.
_VMEM_LIMIT_BYTES = 32 * 1024 * 1024
# Budget for keeping the full K+V context resident (x2 for double-buffering already
# included in the check below). 12 MiB leaves ample headroom on v7x (64 MiB physical).
_KV_RESIDENT_BUDGET_BYTES = 12 * 1024 * 1024


# ---------------------------------------------------------------------------
# Tiling helpers
# ---------------------------------------------------------------------------

def _sublane_granule(dtype):
    """Packed-row granule for the second-minor axis: 8 (f32), 16 (bf16), 32 (int8)."""
    return max(8, 32 // jnp.dtype(dtype).itemsize)


def _pick_tile(dim, target, granule):
    """Largest multiple of `granule` <= `target` that divides `dim`; else `dim`.

    The result always satisfies the TPU BlockSpec constraint for that axis: it is
    either a granule-multiple that evenly tiles the array, or the full dimension.
    """
    t = (min(target, dim) // granule) * granule
    while t >= granule:
        if dim % t == 0:
            return t
        t -= granule
    return dim


# ---------------------------------------------------------------------------
# Tiled linear kernels: out = (x @ W) * out_scale (+ b)
# ---------------------------------------------------------------------------

def _linear2d_kernel(x_ref, w_ref, o_ref, *, out_scale):
    acc = jnp.dot(x_ref[...], w_ref[...], preferred_element_type=jnp.float32)
    if out_scale is not None:
        acc = acc * out_scale
    o_ref[...] = acc.astype(o_ref.dtype)


def _linear2d_bias_kernel(x_ref, w_ref, b_ref, o_ref, *, out_scale):
    acc = jnp.dot(x_ref[...], w_ref[...], preferred_element_type=jnp.float32)
    if out_scale is not None:
        acc = acc * out_scale
    o_ref[...] = (acc + b_ref[...].astype(jnp.float32)).astype(o_ref.dtype)


def _linear3d_kernel(x_ref, w_ref, o_ref, acc_ref, *, out_scale):
    @pl.when(pl.program_id(2) == 0)
    def _():
        acc_ref[...] = jnp.zeros_like(acc_ref)

    acc_ref[...] += jnp.dot(x_ref[...], w_ref[...],
                            preferred_element_type=jnp.float32)

    @pl.when(pl.program_id(2) == pl.num_programs(2) - 1)
    def _():
        acc = acc_ref[...]
        if out_scale is not None:
            acc = acc * out_scale
        o_ref[...] = acc.astype(o_ref.dtype)


def _linear3d_bias_kernel(x_ref, w_ref, b_ref, o_ref, acc_ref, *, out_scale):
    @pl.when(pl.program_id(2) == 0)
    def _():
        acc_ref[...] = jnp.zeros_like(acc_ref)

    acc_ref[...] += jnp.dot(x_ref[...], w_ref[...],
                            preferred_element_type=jnp.float32)

    @pl.when(pl.program_id(2) == pl.num_programs(2) - 1)
    def _():
        acc = acc_ref[...]
        if out_scale is not None:
            acc = acc * out_scale
        o_ref[...] = (acc + b_ref[...].astype(jnp.float32)).astype(o_ref.dtype)


def pallas_linear(x2d, w, b=None, *, out_scale=None,
                  block_m=512, block_n=512, block_k=2048):
    """x2d: (R, Din), w: (Din, Dout), b: (1, Dout) or None -> (R, Dout).

    When Din fits one block (true for CA projections) the K grid axis collapses to a
    fully-parallel 2-D grid with no accumulator carry.  Otherwise a 3-D grid with the
    K reduction innermost ("arbitrary") and an f32 VMEM accumulator is used.
    `out_scale` (if given) is applied once, in f32, to the accumulator.
    """
    R, Din = x2d.shape
    Dout = w.shape[1]
    gm = _sublane_granule(x2d.dtype)
    tm = _pick_tile(R, block_m, gm)
    tn = _pick_tile(Dout, block_n, 128)

    out_shape = jax.ShapeDtypeStruct((R, Dout), x2d.dtype)

    if Din <= block_k:
        # K collapses: no carry, both axes parallel (feeds v7x megacore).
        grid = (R // tm, Dout // tn)
        in_specs = [pl.BlockSpec((tm, Din), lambda i, j: (i, 0)),
                    pl.BlockSpec((Din, tn), lambda i, j: (0, j))]
        out_specs = pl.BlockSpec((tm, tn), lambda i, j: (i, j))
        cp = pltpu.CompilerParams(
            dimension_semantics=("parallel", "parallel"),
            vmem_limit_bytes=_VMEM_LIMIT_BYTES)
        if b is None:
            kern = functools.partial(_linear2d_kernel, out_scale=out_scale)
            return pl.pallas_call(kern, out_shape=out_shape, grid=grid,
                                  in_specs=in_specs, out_specs=out_specs,
                                  compiler_params=cp)(x2d, w)
        in_specs.append(pl.BlockSpec((1, tn), lambda i, j: (0, j)))
        kern = functools.partial(_linear2d_bias_kernel, out_scale=out_scale)
        return pl.pallas_call(kern, out_shape=out_shape, grid=grid,
                              in_specs=in_specs, out_specs=out_specs,
                              compiler_params=cp)(x2d, w, b)

    # Large Din: pipelined K reduction with f32 accumulator.
    tk = _pick_tile(Din, block_k, 128)
    grid = (R // tm, Dout // tn, Din // tk)
    in_specs = [pl.BlockSpec((tm, tk), lambda i, j, k: (i, k)),
                pl.BlockSpec((tk, tn), lambda i, j, k: (k, j))]
    out_specs = pl.BlockSpec((tm, tn), lambda i, j, k: (i, j))
    cp = pltpu.CompilerParams(
        dimension_semantics=("parallel", "parallel", "arbitrary"),
        vmem_limit_bytes=_VMEM_LIMIT_BYTES)
    scratch = [pltpu.VMEM((tm, tn), jnp.float32)]
    if b is None:
        kern = functools.partial(_linear3d_kernel, out_scale=out_scale)
        return pl.pallas_call(kern, out_shape=out_shape, grid=grid,
                              in_specs=in_specs, out_specs=out_specs,
                              scratch_shapes=scratch,
                              compiler_params=cp)(x2d, w)
    in_specs.append(pl.BlockSpec((1, tn), lambda i, j, k: (0, j)))
    kern = functools.partial(_linear3d_bias_kernel, out_scale=out_scale)
    return pl.pallas_call(kern, out_shape=out_shape, grid=grid,
                          in_specs=in_specs, out_specs=out_specs,
                          scratch_shapes=scratch,
                          compiler_params=cp)(x2d, w, b)


# ---------------------------------------------------------------------------
# Multi-head attention + fused output projection
# ---------------------------------------------------------------------------

def _mha_proj_kernel(q_ref, k_ref, v_ref, wo_ref, bo_ref, o_ref,
                     m_ref, l_ref, acc_ref, *, heads, dim_head):
    """One (batch, q-tile, kv-tile) grid step.

    q_ref: (1, tq, H*C)   k_ref/v_ref: (1, tk, H*C)   wo_ref: (H*C, Dq)
    bo_ref: (1, Dq)       o_ref: (1, tq, Dq)
    m_ref/l_ref: (H, tq, 1) f32 scratch    acc_ref: (H, tq, C) f32 scratch
    Online-softmax state is carried across the innermost ("arbitrary") KV axis; with a
    resident KV context that axis has extent 1 and the carry is init+finalize in place.
    The softmax scale is already folded into q (Q-projection epilogue).
    """
    kv_idx = pl.program_id(2)

    @pl.when(kv_idx == 0)
    def _():
        m_ref[...] = jnp.full(m_ref.shape, -jnp.inf, dtype=jnp.float32)
        l_ref[...] = jnp.zeros_like(l_ref)
        acc_ref[...] = jnp.zeros_like(acc_ref)

    q = q_ref[0]                  # (tq, H*C), already scaled
    k = k_ref[0]                  # (tk, H*C)
    v = v_ref[0]                  # (tk, H*C)

    for h in range(heads):        # static unroll; heads is a small constant
        lo = h * dim_head
        hi = lo + dim_head
        q_h = q[:, lo:hi]         # (tq, C)
        k_h = k[:, lo:hi]         # (tk, C)
        v_h = v[:, lo:hi]         # (tk, C)

        # Scores: contract last dims directly -- no k.T materialised.
        s = lax.dot_general(q_h, k_h, (((1,), (1,)), ((), ())),
                            preferred_element_type=jnp.float32)   # (tq, tk) f32

        m_prev = m_ref[h]                                          # (tq, 1)
        m_new = jnp.maximum(m_prev, jnp.max(s, axis=-1, keepdims=True))
        alpha = jnp.exp(m_prev - m_new)                            # rescale old state
        p = jnp.exp(s - m_new)                                     # (tq, tk) f32

        l_ref[h] = alpha * l_ref[h] + jnp.sum(p, axis=-1, keepdims=True)
        acc_ref[h] = alpha * acc_ref[h] + jnp.dot(
            p.astype(v_h.dtype), v_h, preferred_element_type=jnp.float32)
        m_ref[h] = m_new

    @pl.when(kv_idx == pl.num_programs(2) - 1)
    def _():
        # Normalize once on the (tq, C) accumulators (EUP reciprocal), then project
        # with Wo while the tile is still in VMEM and add the bias -- a single
        # lane-dense (tq, Dq) store, no HBM round trip of the (B, N, inner) activation.
        inv_l = pl.reciprocal(l_ref[...], approx=True)             # (H, tq, 1)
        attn = jnp.concatenate(
            [acc_ref[h] * inv_l[h] for h in range(heads)], axis=-1)  # (tq, H*C) f32
        proj = jnp.dot(attn.astype(wo_ref.dtype), wo_ref[...],
                       preferred_element_type=jnp.float32)           # (tq, Dq) f32
        o_ref[0] = (proj + bo_ref[...].astype(jnp.float32)).astype(o_ref.dtype)


def pallas_mha_out_proj(q, k, v, wo, bo, *, heads, dim_head,
                        block_q=256, block_kv=512, kv_resident=None):
    """q: (B, N, H*C), k/v: (B, M, H*C), wo: (H*C, Dq), bo: (1, Dq) -> (B, N, Dq).

    KV context stays resident in VMEM (single KV grid step, no re-DMA across q tiles)
    when it fits the budget; otherwise it is pipelined along an innermost "arbitrary"
    axis with a flash-style online softmax.
    """
    B, N, HC = q.shape
    _, M, _ = k.shape
    Dq = wo.shape[1]
    assert HC == heads * dim_head

    gran = _sublane_granule(q.dtype)
    tq = _pick_tile(N, block_q, gran)

    # K + V, double-buffered by the BlockSpec pipeline.
    kv_bytes = 2 * 2 * M * HC * jnp.dtype(k.dtype).itemsize
    if kv_resident is None:
        kv_resident = kv_bytes <= _KV_RESIDENT_BUDGET_BYTES
    tk = M if kv_resident else _pick_tile(M, block_kv, gran)
    grid = (B, N // tq, M // tk)

    kern = functools.partial(_mha_proj_kernel, heads=heads, dim_head=dim_head)
    kv_spec = pl.BlockSpec((1, tk, HC), lambda b, i, j: (b, j, 0))
    return pl.pallas_call(
        kern,
        out_shape=jax.ShapeDtypeStruct((B, N, Dq), q.dtype),
        grid=grid,
        in_specs=[
            pl.BlockSpec((1, tq, HC), lambda b, i, j: (b, i, 0)),
            kv_spec,
            kv_spec,
            pl.BlockSpec((HC, Dq), lambda b, i, j: (0, 0)),   # Wo: resident
            pl.BlockSpec((1, Dq), lambda b, i, j: (0, 0)),    # bo: resident
        ],
        out_specs=pl.BlockSpec((1, tq, Dq), lambda b, i, j: (b, i, 0)),
        scratch_shapes=[
            pltpu.VMEM((heads, tq, 1), jnp.float32),          # running max
            pltpu.VMEM((heads, tq, 1), jnp.float32),          # running sum
            pltpu.VMEM((heads, tq, dim_head), jnp.float32),   # output accumulator
        ],
        compiler_params=pltpu.CompilerParams(
            dimension_semantics=("parallel", "parallel", "arbitrary"),
            vmem_limit_bytes=_VMEM_LIMIT_BYTES),
    )(q, k, v, wo, bo)


# ---------------------------------------------------------------------------
# CA module: parameter init + forward glue
# ---------------------------------------------------------------------------

def init_ca_params(key, query_dim, key_dim, value_dim, heads, dim_head,
                   dtype=jnp.float32):
    inner = heads * dim_head
    k1, k2, k3, k4, k5 = jax.random.split(key, 5)

    def init(k, fan_in, shape):
        return (jax.random.normal(k, shape, jnp.float32)
                * (fan_in ** -0.5)).astype(dtype)

    # PyTorch nn.Linear stores weight as (out, in); we keep the (in, out)
    # transpose so the kernels compute x @ W directly.
    return {
        "Wq": init(k1, query_dim, (query_dim, inner)),
        "Wk": init(k2, key_dim, (key_dim, inner)),
        "Wv": init(k3, value_dim, (value_dim, inner)),
        "Wo": init(k4, inner, (inner, query_dim)),
        "bo": init(k5, inner, (1, query_dim)),
    }


@functools.partial(jax.jit, static_argnames=(
    "heads", "dim_head", "q_block", "kv_block", "kv_resident"))
def ca_forward(params, x, key, value, *, heads, dim_head,
               q_block=256, kv_block=512, kv_resident=None):
    """CA.forward with mask=None; Dropout(p=0) is identity."""
    B, N, Dq = x.shape
    _, M, Dk = key.shape
    Dv = value.shape[-1]
    inner = heads * dim_head

    # Projections (fully-parallel 2-D Pallas matmuls; K axis collapses for these Din).
    # The xformers/softmax scale is folded into the Q projection epilogue in f32, so
    # the attention kernel never re-multiplies q along the KV axis.
    scale = float(dim_head) ** -0.5
    q = pallas_linear(x.reshape(B * N, Dq), params["Wq"],
                      out_scale=scale).reshape(B, N, inner)
    k = pallas_linear(key.reshape(B * M, Dk), params["Wk"]).reshape(B, M, inner)
    v = pallas_linear(value.reshape(B * M, Dv), params["Wv"]).reshape(B, M, inner)

    # Attention + fused output projection (Wo, bo) in one kernel.
    out = pallas_mha_out_proj(q, k, v, params["Wo"], params["bo"],
                              heads=heads, dim_head=dim_head,
                              block_q=q_block, block_kv=kv_block,
                              kv_resident=kv_resident)
    return out


# ---------------------------------------------------------------------------
# Pure-JAX reference
# ---------------------------------------------------------------------------

def ref_forward(params, x, key, value, heads, dim_head):
    B, N, _ = x.shape
    _, M, _ = key.shape
    H, C = heads, dim_head
    hp = lax.Precision.HIGHEST
    q = jnp.einsum("bnd,de->bne", x, params["Wq"], precision=hp)
    k = jnp.einsum("bmd,de->bme", key, params["Wk"], precision=hp)
    v = jnp.einsum("bmd,de->bme", value, params["Wv"], precision=hp)
    q = q.reshape(B, N, H, C)
    k = k.reshape(B, M, H, C)
    v = v.reshape(B, M, H, C)
    s = jnp.einsum("bnhc,bmhc->bhnm", q, k, precision=hp) * (C ** -0.5)
    p = jax.nn.softmax(s, axis=-1)
    o = jnp.einsum("bhnm,bmhc->bnhc", p, v, precision=hp).reshape(B, N, H * C)
    return jnp.einsum("bne,ed->bnd", o, params["Wo"], precision=hp) + params["bo"]


# ---------------------------------------------------------------------------
# Main
# ---------------------------------------------------------------------------

if __name__ == "__main__":
    # Small, module-consistent shapes.
    B, N, M = 2, 8, 16
    query_dim, key_dim, value_dim = 32, 24, 16
    heads, dim_head = 2, 16

    root = jax.random.PRNGKey(0)
    kp, kx, kk, kv = jax.random.split(root, 4)
    params = init_ca_params(kp, query_dim, key_dim, value_dim, heads, dim_head)
    x = jax.random.normal(kx, (B, N, query_dim), jnp.float32)
    key_in = jax.random.normal(kk, (B, M, key_dim), jnp.float32)
    value_in = jax.random.normal(kv, (B, M, value_dim), jnp.float32)

    ref = ref_forward(params, x, key_in, value_in, heads, dim_head)

    # f32, resident-KV path (default: single KV step, fully parallel grid).
    out = ca_forward(params, x, key_in, value_in, heads=heads, dim_head=dim_head)
    out = jax.block_until_ready(out)
    assert out.shape == (B, N, query_dim), out.shape
    err = float(jnp.max(jnp.abs(out - ref)))
    assert jnp.allclose(out, ref, atol=3e-2, rtol=3e-2), err

    # f32, forced pipelined-KV path: kv_block=8 gives multiple KV grid steps so the
    # online-softmax carry across the "arbitrary" axis is actually exercised.
    out_p = ca_forward(params, x, key_in, value_in, heads=heads, dim_head=dim_head,
                       kv_block=8, kv_resident=False)
    out_p = jax.block_until_ready(out_p)
    err_p = float(jnp.max(jnp.abs(out_p - ref)))
    assert jnp.allclose(out_p, ref, atol=3e-2, rtol=3e-2), err_p

    # bf16 path: bf16 MXU matmul inputs, f32 accumulation + f32 softmax math.
    p16 = jax.tree_util.tree_map(lambda a: a.astype(jnp.bfloat16), params)
    out16 = ca_forward(p16, x.astype(jnp.bfloat16),
                       key_in.astype(jnp.bfloat16),
                       value_in.astype(jnp.bfloat16),
                       heads=heads, dim_head=dim_head)
    out16 = jax.block_until_ready(out16)
    assert out16.shape == (B, N, query_dim) and out16.dtype == jnp.bfloat16
    err16 = float(jnp.max(jnp.abs(out16.astype(jnp.float32) - ref)))
    assert jnp.allclose(out16.astype(jnp.float32), ref,
                        atol=1.5e-1, rtol=1.5e-1), err16

    print("KERNEL_OK")
</pallas_src>

<mosaic_0001>
module attributes {stable_mosaic.version = 11 : i64} {
  func.func @_linear2d_kernel(%arg0: i32, %arg1: i32, %arg2: memref<32x16xf32, #tpu.memory_space<vmem>>, %arg3: memref<16x32xf32, #tpu.memory_space<vmem>>, %arg4: memref<32x32xf32, #tpu.memory_space<vmem>>) attributes {dimension_semantics = [#tpu.dimension_semantics<parallel>, #tpu.dimension_semantics<parallel>], iteration_bounds = array<i64: 1, 1>, scalar_prefetch = 0 : i64, scratch_operands = 0 : i64, tpu.core_type = #tpu.core_type<tc>, window_params = [{transform_indices = @transform_0, window_bounds = array<i64: 32, 16>}, {transform_indices = @transform_1, window_bounds = array<i64: 16, 32>}, {transform_indices = @transform_2, window_bounds = array<i64: 32, 32>}]} {
    %c0 = arith.constant 0 : index
    %c0_0 = arith.constant 0 : index
    %0 = vector.load %arg2[%c0, %c0_0] : memref<32x16xf32, #tpu.memory_space<vmem>>, vector<32x16xf32>
    %c0_1 = arith.constant 0 : index
    %c0_2 = arith.constant 0 : index
    %1 = vector.load %arg3[%c0_1, %c0_2] : memref<16x32xf32, #tpu.memory_space<vmem>>, vector<16x32xf32>
    %cst = arith.constant dense<0.000000e+00> : vector<32x32xf32>
    %2 = tpu.matmul %0, %1, %cst {dimension_numbers = #tpu.dot_dimension_numbers<[1], [0], [0], [1], [0, 0, 1, 1], [], []>} : vector<32x16xf32>, vector<16x32xf32>, vector<32x32xf32> -> vector<32x32xf32>
    %c0_3 = arith.constant 0 : index
    %c0_4 = arith.constant 0 : index
    %3 = vector.load %arg4[%c0_3, %c0_4] : memref<32x32xf32, #tpu.memory_space<vmem>>, vector<32x32xf32>
    tpu.vector_store %arg4[%c0_3, %c0_4], %2 {strides = array<i32>} : memref<32x32xf32, #tpu.memory_space<vmem>>, vector<32x32xf32>,
    return
  }
  func.func @transform_0(%arg0: i32, %arg1: i32) -> (i32, i32) {
    %c0_i32 = arith.constant 0 : i32
    %c0_i32_0 = arith.constant 0 : i32
    return %arg0, %c0_i32 : i32, i32
  }
  func.func @transform_1(%arg0: i32, %arg1: i32) -> (i32, i32) {
    %c0_i32 = arith.constant 0 : i32
    %c0_i32_0 = arith.constant 0 : i32
    return %c0_i32, %arg1 : i32, i32
  }
  func.func @transform_2(%arg0: i32, %arg1: i32) -> (i32, i32) {
    %c0_i32 = arith.constant 0 : i32
    return %arg0, %arg1 : i32, i32
  }
}

module attributes {stable_mosaic.version = 11 : i64} {
  func.func @_mha_proj_kernel(%arg0: i32, %arg1: i32, %arg2: i32, %arg3: memref<1x8x32xf32, #tpu.memory_space<vmem>>, %arg4: memref<1x16x32xf32, #tpu.memory_space<vmem>>, %arg5: memref<1x16x32xf32, #tpu.memory_space<vmem>>, %arg6: memref<32x32xf32, #tpu.memory_space<vmem>>, %arg7: memref<1x32xf32, #tpu.memory_space<vmem>>, %arg8: memref<1x8x32xf32, #tpu.memory_space<vmem>>, %arg9: memref<2x8x1xf32, #tpu.memory_space<vmem>>, %arg10: memref<2x8x1xf32, #tpu.memory_space<vmem>>, %arg11: memref<2x8x16xf32, #tpu.memory_space<vmem>>) attributes {dimension_semantics = [#tpu.dimension_semantics<parallel>, #tpu.dimension_semantics<parallel>, #tpu.dimension_semantics<arbitrary>], iteration_bounds = array<i64: 2, 1, 1>, scalar_prefetch = 0 : i64, scratch_operands = 3 : i64, tpu.core_type = #tpu.core_type<tc>, window_params = [{transform_indices = @transform_0, window_bounds = array<i64: 1, 8, 32>}, {transform_indices = @transform_1, window_bounds = array<i64: 1, 16, 32>}, {transform_indices = @transform_2, window_bounds = array<i64: 1, 16, 32>}, {pipeline_mode = #tpu.pipeline_mode<synchronous>, transform_indices = @transform_3, window_bounds = array<i64: 32, 32>}, {pipeline_mode = #tpu.pipeline_mode<synchronous>, transform_indices = @transform_4, window_bounds = array<i64: 1, 32>}, {transform_indices = @transform_5, window_bounds = array<i64: 1, 8, 32>}]} {
    %c0_i32 = arith.constant 0 : i32
    %0 = arith.cmpi eq, %arg2, %c0_i32 : i32
    %1 = arith.extui %0 : i1 to i32
    %c0_i32_0 = arith.constant 0 : i32
    %2 = arith.cmpi ne, %1, %c0_i32_0 : i32
    scf.if %2 {
      %cst_53 = arith.constant 0xFF800000 : f32
      %82 = vector.broadcast %cst_53 : f32 to vector<2x8x1xf32>
      %c0_54 = arith.constant 0 : index
      %c0_55 = arith.constant 0 : index
      %c0_56 = arith.constant 0 : index
      %83 = vector.load %arg9[%c0_54, %c0_55, %c0_56] : memref<2x8x1xf32, #tpu.memory_space<vmem>>, vector<2x8x1xf32>
      tpu.vector_store %arg9[%c0_54, %c0_55, %c0_56], %82 {strides = array<i32>} : memref<2x8x1xf32, #tpu.memory_space<vmem>>, vector<2x8x1xf32>,
      %cst_57 = arith.constant 0.000000e+00 : f32
      %84 = vector.broadcast %cst_57 : f32 to vector<2x8x1xf32>
      %c0_58 = arith.constant 0 : index
      %c0_59 = arith.constant 0 : index
      %c0_60 = arith.constant 0 : index
      %85 = vector.load %arg10[%c0_58, %c0_59, %c0_60] : memref<2x8x1xf32, #tpu.memory_space<vmem>>, vector<2x8x1xf32>
      tpu.vector_store %arg10[%c0_58, %c0_59, %c0_60], %84 {strides = array<i32>} : memref<2x8x1xf32, #tpu.memory_space<vmem>>, vector<2x8x1xf32>,
      %cst_61 = arith.constant 0.000000e+00 : f32
      %86 = vector.broadcast %cst_61 : f32 to vector<2x8x16xf32>
      %c0_62 = arith.constant 0 : index
      %c0_63 = arith.constant 0 : index
      %c0_64 = arith.constant 0 : index
      %87 = vector.load %arg11[%c0_62, %c0_63, %c0_64] : memref<2x8x16xf32, #tpu.memory_space<vmem>>, vector<2x8x16xf32>
      tpu.vector_store %arg11[%c0_62, %c0_63, %c0_64], %86 {strides = array<i32>} : memref<2x8x16xf32, #tpu.memory_space<vmem>>, vector<2x8x16xf32>,
    } else {
    }
    %c0 = arith.constant 0 : index
    %c0_1 = arith.constant 0 : index
    %c0_2 = arith.constant 0 : index
    %3 = vector.load %arg3[%c0, %c0_1, %c0_2] : memref<1x8x32xf32, #tpu.memory_space<vmem>>, vector<1x8x32xf32>
    %4 = vector.shape_cast %3 : vector<1x8x32xf32> to vector<8x32xf32>
    %c0_3 = arith.constant 0 : index
    %c0_4 = arith.constant 0 : index
    %c0_5 = arith.constant 0 : index
    %5 = vector.load %arg4[%c0_3, %c0_4, %c0_5] : memref<1x16x32xf32, #tpu.memory_space<vmem>>, vector<1x16x32xf32>
    %6 = vector.shape_cast %5 : vector<1x16x32xf32> to vector<16x32xf32>
    %c0_6 = arith.constant 0 : index
    %c0_7 = arith.constant 0 : index
    %c0_8 = arith.constant 0 : index
    %7 = vector.load %arg5[%c0_6, %c0_7, %c0_8] : memref<1x16x32xf32, #tpu.memory_space<vmem>>, vector<1x16x32xf32>
    %8 = vector.shape_cast %7 : vector<1x16x32xf32> to vector<16x32xf32>
    %9 = vector.extract_strided_slice %4 {offsets = [0, 0], sizes = [8, 16], strides = [1, 1]} : vector<8x32xf32> to vector<8x16xf32>
    %10 = vector.extract_strided_slice %6 {offsets = [0, 0], sizes = [16, 16], strides = [1, 1]} : vector<16x32xf32> to vector<16x16xf32>
    %11 = vector.extract_strided_slice %8 {offsets = [0, 0], sizes = [16, 16], strides = [1, 1]} : vector<16x32xf32> to vector<16x16xf32>
    %cst = arith.constant dense<0.000000e+00> : vector<8x16xf32>
    %12 = tpu.matmul %9, %10, %cst {dimension_numbers = #tpu.dot_dimension_numbers<[1], [1], [0], [0], [0, 0, 1, 0], [], []>} : vector<8x16xf32>, vector<16x16xf32>, vector<8x16xf32> -> vector<8x16xf32>
    %c0_9 = arith.constant 0 : index
    %c0_10 = arith.constant 0 : index
    %c0_11 = arith.constant 0 : index
    %13 = vector.load %arg9[%c0_9, %c0_10, %c0_11] : memref<2x8x1xf32, #tpu.memory_space<vmem>>, vector<1x8x1xf32>
    %14 = vector.shape_cast %13 : vector<1x8x1xf32> to vector<8x1xf32>
    %cst_12 = arith.constant dense<0xFF800000> : vector<8xf32>
    %15 = vector.multi_reduction <maximumf>, %12, %cst_12 [1] : vector<8x16xf32> to vector<8xf32>
    %16 = vector.shape_cast %15 : vector<8xf32> to vector<8x1xf32>
    %17 = arith.maximumf %14, %16 : vector<8x1xf32>
    %18 = arith.subf %14, %17 : vector<8x1xf32>
    %19 = math.exp %18 : vector<8x1xf32>
    %20 = vector.broadcast %17 : vector<8x1xf32> to vector<8x16xf32>
    %21 = arith.subf %12, %20 : vector<8x16xf32>
    %22 = math.exp %21 : vector<8x16xf32>
    %c0_13 = arith.constant 0 : index
    %c0_14 = arith.constant 0 : index
    %c0_15 = arith.constant 0 : index
    %23 = vector.load %arg10[%c0_13, %c0_14, %c0_15] : memref<2x8x1xf32, #tpu.memory_space<vmem>>, vector<1x8x1xf32>
    %24 = vector.shape_cast %23 : vector<1x8x1xf32> to vector<8x1xf32>
    %25 = arith.mulf %19, %24 : vector<8x1xf32>
    %cst_16 = arith.constant dense<0.000000e+00> : vector<8xf32>
    %26 = vector.multi_reduction <add>, %22, %cst_16 [1] : vector<8x16xf32> to vector<8xf32>
    %27 = vector.shape_cast %26 : vector<8xf32> to vector<8x1xf32>
    %28 = arith.addf %25, %27 : vector<8x1xf32>
    %c0_17 = arith.constant 0 : index
    %c0_18 = arith.constant 0 : index
    %c0_19 = arith.constant 0 : index
    %29 = vector.load %arg10[%c0_17, %c0_18, %c0_19] : memref<2x8x1xf32, #tpu.memory_space<vmem>>, vector<1x8x1xf32>
    %30 = vector.shape_cast %29 : vector<1x8x1xf32> to vector<8x1xf32>
    %31 = vector.shape_cast %28 : vector<8x1xf32> to vector<1x8x1xf32>
    tpu.vector_store %arg10[%c0_17, %c0_18, %c0_19], %31 {strides = array<i32>} : memref<2x8x1xf32, #tpu.memory_space<vmem>>, vector<1x8x1xf32>,
    %c0_20 = arith.constant 0 : index
    %c0_21 = arith.constant 0 : index
    %c0_22 = arith.constant 0 : index
    %32 = vector.load %arg11[%c0_20, %c0_21, %c0_22] : memref<2x8x16xf32, #tpu.memory_space<vmem>>, vector<1x8x16xf32>
    %33 = vector.shape_cast %32 : vector<1x8x16xf32> to vector<8x16xf32>
    %34 = vector.broadcast %19 : vector<8x1xf32> to vector<8x16xf32>
    %35 = arith.mulf %34, %33 : vector<8x16xf32>
    %cst_23 = arith.constant dense<0.000000e+00> : vector<8x16xf32>
    %36 = tpu.matmul %22, %11, %cst_23 {dimension_numbers = #tpu.dot_dimension_numbers<[1], [0], [0], [1], [0, 0, 1, 1], [], []>} : vector<8x16xf32>, vector<16x16xf32>, vector<8x16xf32> -> vector<8x16xf32>
    %37 = arith.addf %35, %36 : vector<8x16xf32>
    %c0_24 = arith.constant 0 : index
    %c0_25 = arith.constant 0 : index
    %c0_26 = arith.constant 0 : index
    %38 = vector.load %arg11[%c0_24, %c0_25, %c0_26] : memref<2x8x16xf32, #tpu.memory_space<vmem>>, vector<1x8x16xf32>
    %39 = vector.shape_cast %38 : vector<1x8x16xf32> to vector<8x16xf32>
    %40 = vector.shape_cast %37 : vector<8x16xf32> to vector<1x8x16xf32>
    tpu.vector_store %arg11[%c0_24, %c0_25, %c0_26], %40 {strides = array<i32>} : memref<2x8x16xf32, #tpu.memory_space<vmem>>, vector<1x8x16xf32>,
    %c0_27 = arith.constant 0 : index
    %c0_28 = arith.constant 0 : index
    %c0_29 = arith.constant 0 : index
    %41 = vector.load %arg9[%c0_27, %c0_28, %c0_29] : memref<2x8x1xf32, #tpu.memory_space<vmem>>, vector<1x8x1xf32>
    %42 = vector.shape_cast %41 : vector<1x8x1xf32> to vector<8x1xf32>
    %43 = vector.shape_cast %17 : vector<8x1xf32> to vector<1x8x1xf32>
    tpu.vector_store %arg9[%c0_27, %c0_28, %c0_29], %43 {strides = array<i32>} : memref<2x8x1xf32, #tpu.memory_space<vmem>>, vector<1x8x1xf32>,
    %44 = vector.extract_strided_slice %4 {offsets = [0, 16], sizes = [8, 16], strides = [1, 1]} : vector<8x32xf32> to vector<8x16xf32>
    %45 = vector.extract_strided_slice %6 {offsets = [0, 16], sizes = [16, 16], strides = [1, 1]} : vector<16x32xf32> to vector<16x16xf32>
    %46 = vector.extract_strided_slice %8 {offsets = [0, 16], sizes = [16, 16], strides = [1, 1]} : vector<16x32xf32> to vector<16x16xf32>
    %cst_30 = arith.constant dense<0.000000e+00> : vector<8x16xf32>
    %47 = tpu.matmul %44, %45, %cst_30 {dimension_numbers = #tpu.dot_dimension_numbers<[1], [1], [0], [0], [0, 0, 1, 0], [], []>} : vector<8x16xf32>, vector<16x16xf32>, vector<8x16xf32> -> vector<8x16xf32>
    %c1 = arith.constant 1 : index
    %c0_31 = arith.constant 0 : index
    %c0_32 = arith.constant 0 : index
    %48 = vector.load %arg9[%c1, %c0_31, %c0_32] : memref<2x8x1xf32, #tpu.memory_space<vmem>>, vector<1x8x1xf32>
    %49 = vector.shape_cast %48 : vector<1x8x1xf32> to vector<8x1xf32>
    %cst_33 = arith.constant dense<0xFF800000> : vector<8xf32>
    %50 = vector.multi_reduction <maximumf>, %47, %cst_33 [1] : vector<8x16xf32> to vector<8xf32>
    %51 = vector.shape_cast %50 : vector<8xf32> to vector<8x1xf32>
    %52 = arith.maximumf %49, %51 : vector<8x1xf32>
    %53 = arith.subf %49, %52 : vector<8x1xf32>
    %54 = math.exp %53 : vector<8x1xf32>
    %55 = vector.broadcast %52 : vector<8x1xf32> to vector<8x16xf32>
    %56 = arith.subf %47, %55 : vector<8x16xf32>
    %57 = math.exp %56 : vector<8x16xf32>
    %c1_34 = arith.constant 1 : index
    %c0_35 = arith.constant 0 : index
    %c0_36 = arith.constant 0 : index
    %58 = vector.load %arg10[%c1_34, %c0_35, %c0_36] : memref<2x8x1xf32, #tpu.memory_space<vmem>>, vector<1x8x1xf32>
    %59 = vector.shape_cast %58 : vector<1x8x1xf32> to vector<8x1xf32>
    %60 = arith.mulf %54, %59 : vector<8x1xf32>
    %cst_37 = arith.constant dense<0.000000e+00> : vector<8xf32>
    %61 = vector.multi_reduction <add>, %57, %cst_37 [1] : vector<8x16xf32> to vector<8xf32>
    %62 = vector.shape_cast %61 : vector<8xf32> to vector<8x1xf32>
    %63 = arith.addf %60, %62 : vector<8x1xf32>
    %c1_38 = arith.constant 1 : index
    %c0_39 = arith.constant 0 : index
    %c0_40 = arith.constant 0 : index
    %64 = vector.load %arg10[%c1_38, %c0_39, %c0_40] : memref<2x8x1xf32, #tpu.memory_space<vmem>>, vector<1x8x1xf32>
    %65 = vector.shape_cast %64 : vector<1x8x1xf32> to vector<8x1xf32>
    %66 = vector.shape_cast %63 : vector<8x1xf32> to vector<1x8x1xf32>
    tpu.vector_store %arg10[%c1_38, %c0_39, %c0_40], %66 {strides = array<i32>} : memref<2x8x1xf32, #tpu.memory_space<vmem>>, vector<1x8x1xf32>,
    %c1_41 = arith.constant 1 : index
    %c0_42 = arith.constant 0 : index
    %c0_43 = arith.constant 0 : index
    %67 = vector.load %arg11[%c1_41, %c0_42, %c0_43] : memref<2x8x16xf32, #tpu.memory_space<vmem>>, vector<1x8x16xf32>
    %68 = vector.shape_cast %67 : vector<1x8x16xf32> to vector<8x16xf32>
    %69 = vector.broadcast %54 : vector<8x1xf32> to vector<8x16xf32>
    %70 = arith.mulf %69, %68 : vector<8x16xf32>
    %cst_44 = arith.constant dense<0.000000e+00> : vector<8x16xf32>
    %71 = tpu.matmul %57, %46, %cst_44 {dimension_numbers = #tpu.dot_dimension_numbers<[1], [0], [0], [1], [0, 0, 1, 1], [], []>} : vector<8x16xf32>, vector<16x16xf32>, vector<8x16xf32> -> vector<8x16xf32>
    %72 = arith.addf %70, %71 : vector<8x16xf32>
    %c1_45 = arith.constant 1 : index
    %c0_46 = arith.constant 0 : index
    %c0_47 = arith.constant 0 : index
    %73 = vector.load %arg11[%c1_45, %c0_46, %c0_47] : memref<2x8x16xf32, #tpu.memory_space<vmem>>, vector<1x8x16xf32>
    %74 = vector.shape_cast %73 : vector<1x8x16xf32> to vector<8x16xf32>
    %75 = vector.shape_cast %72 : vector<8x16xf32> to vector<1x8x16xf32>
    tpu.vector_store %arg11[%c1_45, %c0_46, %c0_47], %75 {strides = array<i32>} : memref<2x8x16xf32, #tpu.memory_space<vmem>>, vector<1x8x16xf32>,
    %c1_48 = arith.constant 1 : index
    %c0_49 = arith.constant 0 : index
    %c0_50 = arith.constant 0 : index
    %76 = vector.load %arg9[%c1_48, %c0_49, %c0_50] : memref<2x8x1xf32, #tpu.memory_space<vmem>>, vector<1x8x1xf32>
    %77 = vector.shape_cast %76 : vector<1x8x1xf32> to vector<8x1xf32>
    %78 = vector.shape_cast %52 : vector<8x1xf32> to vector<1x8x1xf32>
    tpu.vector_store %arg9[%c1_48, %c0_49, %c0_50], %78 {strides = array<i32>} : memref<2x8x1xf32, #tpu.memory_space<vmem>>, vector<1x8x1xf32>,
    %c0_i32_51 = arith.constant 0 : i32
    %79 = arith.cmpi eq, %arg2, %c0_i32_51 : i32
    %80 = arith.extui %79 : i1 to i32
    %c0_i32_52 = arith.constant 0 : i32
    %81 = arith.cmpi ne, %80, %c0_i32_52 : i32
    scf.if %81 {
      %c0_53 = arith.constant 0 : index
      %c0_54 = arith.constant 0 : index
      %c0_55 = arith.constant 0 : index
      %82 = vector.load %arg10[%c0_53, %c0_54, %c0_55] : memref<2x8x1xf32, #tpu.memory_space<vmem>>, vector<2x8x1xf32>
      %83 = tpu.reciprocal %82 {approx = true} : vector<2x8x1xf32> -> vector<2x8x1xf32>
      %c0_56 = arith.constant 0 : index
      %c0_57 = arith.constant 0 : index
      %c0_58 = arith.constant 0 : index
      %84 = vector.load %arg11[%c0_56, %c0_57, %c0_58] : memref<2x8x16xf32, #tpu.memory_space<vmem>>, vector<1x8x16xf32>
      %85 = vector.shape_cast %84 : vector<1x8x16xf32> to vector<8x16xf32>
      %86 = vector.extract_strided_slice %83 {offsets = [0, 0, 0], sizes = [1, 8, 1], strides = [1, 1, 1]} : vector<2x8x1xf32> to vector<1x8x1xf32>
      %87 = vector.shape_cast %86 : vector<1x8x1xf32> to vector<8x1xf32>
      %88 = vector.broadcast %87 : vector<8x1xf32> to vector<8x16xf32>
      %89 = arith.mulf %85, %88 : vector<8x16xf32>
      %c1_59 = arith.constant 1 : index
      %c0_60 = arith.constant 0 : index
      %c0_61 = arith.constant 0 : index
      %90 = vector.load %arg11[%c1_59, %c0_60, %c0_61] : memref<2x8x16xf32, #tpu.memory_space<vmem>>, vector<1x8x16xf32>
      %91 = vector.shape_cast %90 : vector<1x8x16xf32> to vector<8x16xf32>
      %92 = vector.extract_strided_slice %83 {offsets = [1, 0, 0], sizes = [1, 8, 1], strides = [1, 1, 1]} : vector<2x8x1xf32> to vector<1x8x1xf32>
      %93 = vector.shape_cast %92 : vector<1x8x1xf32> to vector<8x1xf32>
      %94 = vector.broadcast %93 : vector<8x1xf32> to vector<8x16xf32>
      %95 = arith.mulf %91, %94 : vector<8x16xf32>
      %96 = tpu.concatenate %89, %95 in 1 : vector<8x16xf32>, vector<8x16xf32> -> vector<8x32xf32>
      %c0_62 = arith.constant 0 : index
      %c0_63 = arith.constant 0 : index
      %97 = vector.load %arg6[%c0_62, %c0_63] : memref<32x32xf32, #tpu.memory_space<vmem>>, vector<32x32xf32>
      %cst_64 = arith.constant dense<0.000000e+00> : vector<8x32xf32>
      %98 = tpu.matmul %96, %97, %cst_64 {dimension_numbers = #tpu.dot_dimension_numbers<[1], [0], [0], [1], [0, 0, 1, 1], [], []>} : vector<8x32xf32>, vector<32x32xf32>, vector<8x32xf32> -> vector<8x32xf32>
      %c0_65 = arith.constant 0 : index
      %c0_66 = arith.constant 0 : index
      %99 = vector.load %arg7[%c0_65, %c0_66] : memref<1x32xf32, #tpu.memory_space<vmem>>, vector<1x32xf32>
      %100 = vector.broadcast %99 : vector<1x32xf32> to vector<8x32xf32>
      %101 = arith.addf %98, %100 : vector<8x32xf32>
      %c0_67 = arith.constant 0 : index
      %c0_68 = arith.constant 0 : index
      %c0_69 = arith.constant 0 : index
      %102 = vector.load %arg8[%c0_67, %c0_68, %c0_69] : memref<1x8x32xf32, #tpu.memory_space<vmem>>, vector<1x8x32xf32>
      %103 = vector.shape_cast %102 : vector<1x8x32xf32> to vector<8x32xf32>
      %104 = vector.shape_cast %101 : vector<8x32xf32> to vector<1x8x32xf32>
      tpu.vector_store %arg8[%c0_67, %c0_68, %c0_69], %104 {strides = array<i32>} : memref<1x8x32xf32, #tpu.memory_space<vmem>>, vector<1x8x32xf32>,
    } else {
    }
    return
  }
  func.func @transform_0(%arg0: i32, %arg1: i32, %arg2: i32) -> (i32, i32, i32) {
    %c0_i32 = arith.constant 0 : i32
    %c0_i32_0 = arith.constant 0 : i32
    return %arg0, %arg1, %c0_i32 : i32, i32, i32
  }
  func.func @transform_1(%arg0: i32, %arg1: i32, %arg2: i32) -> (i32, i32, i32) {
    %c0_i32 = arith.constant 0 : i32
    %c0_i32_0 = arith.constant 0 : i32
    return %arg0, %arg2, %c0_i32 : i32, i32, i32
  }
  func.func @transform_2(%arg0: i32, %arg1: i32, %arg2: i32) -> (i32, i32, i32) {
    %c0_i32 = arith.constant 0 : i32
    %c0_i32_0 = arith.constant 0 : i32
    return %arg0, %arg2, %c0_i32 : i32, i32, i32
  }
  func.func @transform_3(%arg0: i32, %arg1: i32, %arg2: i32) -> (i32, i32) {
    %c0_i32 = arith.constant 0 : i32
    %c0_i32_0 = arith.constant 0 : i32
    %c0_i32_1 = arith.constant 0 : i32
    return %c0_i32, %c0_i32_0 : i32, i32
  }
  func.func @transform_4(%arg0: i32, %arg1: i32, %arg2: i32) -> (i32, i32) {
    %c0_i32 = arith.constant 0 : i32
    %c0_i32_0 = arith.constant 0 : i32
    %c0_i32_1 = arith.constant 0 : i32
    return %c0_i32, %c0_i32_0 : i32, i32
  }
  func.func @transform_5(%arg0: i32, %arg1: i32, %arg2: i32) -> (i32, i32, i32) {
    %c0_i32 = arith.constant 0 : i32
    %c0_i32_0 = arith.constant 0 : i32
    return %arg0, %arg1, %c0_i32 : i32, i32, i32
  }
}

module attributes {stable_mosaic.version = 11 : i64} {
  func.func @_linear2d_kernel(%arg0: i32, %arg1: i32, %arg2: memref<32x24xf32, #tpu.memory_space<vmem>>, %arg3: memref<24x32xf32, #tpu.memory_space<vmem>>, %arg4: memref<32x32xf32, #tpu.memory_space<vmem>>) attributes {dimension_semantics = [#tpu.dimension_semantics<parallel>, #tpu.dimension_semantics<parallel>], iteration_bounds = array<i64: 1, 1>, scalar_prefetch = 0 : i64, scratch_operands = 0 : i64, tpu.core_type = #tpu.core_type<tc>, window_params = [{transform_indices = @transform_0, window_bounds = array<i64: 32, 24>}, {transform_indices = @transform_1, window_bounds = array<i64: 24, 32>}, {transform_indices = @transform_2, window_bounds = array<i64: 32, 32>}]} {
    %c0 = arith.constant 0 : index
    %c0_0 = arith.constant 0 : index
    %0 = vector.load %arg2[%c0, %c0_0] : memref<32x24xf32, #tpu.memory_space<vmem>>, vector<32x24xf32>
    %c0_1 = arith.constant 0 : index
    %c0_2 = arith.constant 0 : index
    %1 = vector.load %arg3[%c0_1, %c0_2] : memref<24x32xf32, #tpu.memory_space<vmem>>, vector<24x32xf32>
    %cst = arith.constant dense<0.000000e+00> : vector<32x32xf32>
    %2 = tpu.matmul %0, %1, %cst {dimension_numbers = #tpu.dot_dimension_numbers<[1], [0], [0], [1], [0, 0, 1, 1], [], []>} : vector<32x24xf32>, vector<24x32xf32>, vector<32x32xf32> -> vector<32x32xf32>
    %c0_3 = arith.constant 0 : index
    %c0_4 = arith.constant 0 : index
    %3 = vector.load %arg4[%c0_3, %c0_4] : memref<32x32xf32, #tpu.memory_space<vmem>>, vector<32x32xf32>
    tpu.vector_store %arg4[%c0_3, %c0_4], %2 {strides = array<i32>} : memref<32x32xf32, #tpu.memory_space<vmem>>, vector<32x32xf32>,
    return
  }
  func.func @transform_0(%arg0: i32, %arg1: i32) -> (i32, i32) {
    %c0_i32 = arith.constant 0 : i32
    %c0_i32_0 = arith.constant 0 : i32
    return %arg0, %c0_i32 : i32, i32
  }
  func.func @transform_1(%arg0: i32, %arg1: i32) -> (i32, i32) {
    %c0_i32 = arith.constant 0 : i32
    %c0_i32_0 = arith.constant 0 : i32
    return %c0_i32, %arg1 : i32, i32
  }
  func.func @transform_2(%arg0: i32, %arg1: i32) -> (i32, i32) {
    %c0_i32 = arith.constant 0 : i32
    return %arg0, %arg1 : i32, i32
  }
}

module attributes {stable_mosaic.version = 11 : i64} {
  func.func @_linear2d_kernel(%arg0: i32, %arg1: i32, %arg2: memref<16x32xf32, #tpu.memory_space<vmem>>, %arg3: memref<32x32xf32, #tpu.memory_space<vmem>>, %arg4: memref<16x32xf32, #tpu.memory_space<vmem>>) attributes {dimension_semantics = [#tpu.dimension_semantics<parallel>, #tpu.dimension_semantics<parallel>], iteration_bounds = array<i64: 1, 1>, scalar_prefetch = 0 : i64, scratch_operands = 0 : i64, tpu.core_type = #tpu.core_type<tc>, window_params = [{transform_indices = @transform_0, window_bounds = array<i64: 16, 32>}, {transform_indices = @transform_1, window_bounds = array<i64: 32, 32>}, {transform_indices = @transform_2, window_bounds = array<i64: 16, 32>}]} {
    %c0 = arith.constant 0 : index
    %c0_0 = arith.constant 0 : index
    %0 = vector.load %arg2[%c0, %c0_0] : memref<16x32xf32, #tpu.memory_space<vmem>>, vector<16x32xf32>
    %c0_1 = arith.constant 0 : index
    %c0_2 = arith.constant 0 : index
    %1 = vector.load %arg3[%c0_1, %c0_2] : memref<32x32xf32, #tpu.memory_space<vmem>>, vector<32x32xf32>
    %cst = arith.constant dense<0.000000e+00> : vector<16x32xf32>
    %2 = tpu.matmul %0, %1, %cst {dimension_numbers = #tpu.dot_dimension_numbers<[1], [0], [0], [1], [0, 0, 1, 1], [], []>} : vector<16x32xf32>, vector<32x32xf32>, vector<16x32xf32> -> vector<16x32xf32>
    %cst_3 = arith.constant 2.500000e-01 : f32
    %3 = vector.broadcast %cst_3 : f32 to vector<16x32xf32>
    %4 = arith.mulf %2, %3 : vector<16x32xf32>
    %c0_4 = arith.constant 0 : index
    %c0_5 = arith.constant 0 : index
    %5 = vector.load %arg4[%c0_4, %c0_5] : memref<16x32xf32, #tpu.memory_space<vmem>>, vector<16x32xf32>
    tpu.vector_store %arg4[%c0_4, %c0_5], %4 {strides = array<i32>} : memref<16x32xf32, #tpu.memory_space<vmem>>, vector<16x32xf32>,
    return
  }
  func.func @transform_0(%arg0: i32, %arg1: i32) -> (i32, i32) {
    %c0_i32 = arith.constant 0 : i32
    %c0_i32_0 = arith.constant 0 : i32
    return %arg0, %c0_i32 : i32, i32
  }
  func.func @transform_1(%arg0: i32, %arg1: i32) -> (i32, i32) {
    %c0_i32 = arith.constant 0 : i32
    %c0_i32_0 = arith.constant 0 : i32
    return %c0_i32, %arg1 : i32, i32
  }
  func.func @transform_2(%arg0: i32, %arg1: i32) -> (i32, i32) {
    %c0_i32 = arith.constant 0 : i32
    return %arg0, %arg1 : i32, i32
  }
}

</mosaic_0001>

<llo_original>
// kernel: ca_forward.6
$region0: #{ca_forward.6}
  #allocation0 [shape = 'u32[]', space=smem, size = 0x4, offset = 0x4, fixed_abs, tag = 'smem constant byte address 0x4 - core index']
  #allocation1 [shape = 'u32[144,128]{1,0:T(1,128)}', space=vmem, size = 0x12000, scoped, tag = 'internal scratch']
  %s0 = inlined_call_operand.vmem [shape: f32[32,16], index: 0, kind: input, shape index: {}]
  %s1 = inlined_call_operand.vmem [shape: f32[16,32], index: 1, kind: input, shape index: {}]
  %s2 = inlined_call_operand.vmem [shape: f32[32,32], index: 2, kind: output, shape index: {}]
  %s3 = sld [smem:[#allocation0]]
  $region18: #{ca_forward.6} parent=0
    _
  %s5 = ssub.s32 1, %s3
  %s6 = scalar_select 0, %s5, %s3
  // Predicated region
  $region2: #{ca_forward.6} parent=0 // pred_check
    _
  $region3: #{ca_forward.6} parent=0 // pred_check_branch
    %8 = sbr.rel (0) target = $region5
  $region4: #{ca_forward.6} parent=0 // pred_region
    _
  $region5: #{ca_forward.6} parent=0 // pred_fallthru
    _
  // Predicated region
  $region6: #{ca_forward.6} parent=0 // pred_check
    _
  $region7: #{ca_forward.6} parent=0 // pred_check_branch
    %10 = sbr.rel (0) target = $region9
  $region8: #{ca_forward.6} parent=0 // pred_region
    _
  $region9: #{ca_forward.6} parent=0 // pred_fallthru
    _
  %v11 = vld [vmem:[%s0] sm:$0xff]
  %v12 = vld [vmem:[%s0 + $0x8] sm:$0xff]
  %v13 = vld [vmem:[%s0 + $0x10] sm:$0xff]
  %v14 = vld [vmem:[%s0 + $0x18] sm:$0xff]
  %v15 = vld [vmem:[%s1] sm:$0xff]
  %v16 = vld [vmem:[%s1 + $0x8] sm:$0xff]
  %vm17 = vcmask 130048
  %v19 = vsel %vm17, %v11, 0
  %v22 = vsel %vm17, %v12, 0
  %v25 = vsel %vm17, %v13, 0
  %v28 = vsel %vm17, %v14, 0
  %30 = vmatprep.subr.mxu0 0.0
  %31 = vmatpush1.msra.mxu0 %v15
  %32 = vmatprep.subr.mxu0 0.0
  %33 = vmatpush1.msra.mxu0 %v16
  %34 = vmatprep.subr.mxu0 0.0
  %35 = vmatpush1.msra.mxu0 0.0
  %36 = vmatprep.subr.mxu0 0.0
  %37 = vmatpush1.msra.mxu0 0.0
  %38 = vmatprep.subr.mxu0 0.0
  %39 = vmatpush1.msra.mxu0 0.0
  %40 = vmatprep.subr.mxu0 0.0
  %41 = vmatpush1.msra.mxu0 0.0
  %42 = vmatprep.subr.mxu0 0.0
  %43 = vmatpush1.msra.mxu0 0.0
  %44 = vmatprep.subr.mxu0 0.0
  %45 = vmatpush1.msra.mxu0 0.0
  %46 = vmatprep.subr.mxu0 0.0
  %47 = vmatpush1.msra.mxu0 0.0
  %48 = vmatprep.subr.mxu0 0.0
  %49 = vmatpush1.msra.mxu0 0.0
  %50 = vmatprep.subr.mxu0 0.0
  %51 = vmatpush1.msra.mxu0 0.0
  %52 = vmatprep.subr.mxu0 0.0
  %53 = vmatpush1.msra.mxu0 0.0
  %54 = vmatprep.subr.mxu0 0.0
  %55 = vmatpush1.msra.mxu0 0.0
  %56 = vmatprep.subr.mxu0 0.0
  %57 = vmatpush1.msra.mxu0 0.0
  %58 = vmatprep.subr.mxu0 0.0
  %59 = vmatpush1.msra.mxu0 0.0
  %60 = vmatprep.subr.mxu0 0.0
  %61 = vmatpush1.msra.mxu0 0.0
  %62 = vmatprep.subr.mxu0 0.0
  %63 = vmatpush1.msra.mxu0 0.0
  %64 = vmatprep.subr.mxu0 0.0
  %65 = vmatpush1.msra.mxu0 0.0
  %66 = vmatprep.subr.mxu0 0.0
  %67 = vmatpush1.msra.mxu0 0.0
  %68 = vmatprep.subr.mxu0 0.0
  %69 = vmatpush1.msra.mxu0 0.0
  %70 = vmatprep.subr.mxu0 0.0
  %71 = vmatpush1.msra.mxu0 0.0
  %72 = vmatprep.subr.mxu0 0.0
  %73 = vmatpush1.msra.mxu0 0.0
  %74 = vmatprep.subr.mxu0 0.0
  %75 = vmatpush1.msra.mxu0 0.0
  %76 = vmatprep.subr.mxu0 0.0
  %77 = vmatpush1.msra.mxu0 0.0
  %78 = vmatprep.subr.mxu0 0.0
  %79 = vmatpush1.msra.mxu0 0.0
  %80 = vmatprep.subr.mxu0 0.0
  %81 = vmatpush1.msra.mxu0 0.0
  %82 = vmatprep.subr.mxu0 0.0
  %83 = vmatpush1.msra.mxu0 0.0
  %84 = vmatprep.subr.mxu0 0.0
  %85 = vmatpush1.msra.mxu0 0.0
  %86 = vmatprep.subr.mxu0 0.0
  %87 = vmatpush1.msra.mxu0 0.0
  %88 = vmatprep.subr.mxu0 0.0
  %89 = vmatpush1.msra.mxu0 0.0
  %90 = vmatprep.subr.mxu0 0.0
  %91 = vmatpush1.msra.mxu0 0.0
  %92 = vmatprep.subr.mxu0 0.0
  %93 = vmatpush1.msra.mxu0 0.0
  %94 = vmatprep.mubr.f32.mxu0 0.0
  %95 = vmatmul.mubr.f32.gmra.mrb[0].mxu0 %v19
  %v96 = vpop.f32.mrb[0].mxu0
  %v97 = vadd.f32 0.0, %v96
  %v98 = vpop.f32.mrb[0].mxu0
  %99 = vmatprep.mubr.f32.mxu0 0.0
  %100 = vmatmul.mubr.f32.gmra.mrb[0].mxu0 %v22
  %v101 = vpop.f32.mrb[0].mxu0
  %v102 = vadd.f32 0.0, %v101
  %v103 = vpop.f32.mrb[0].mxu0
  %104 = vmatprep.mubr.f32.mxu0 0.0
  %105 = vmatmul.mubr.f32.gmra.mrb[0].mxu0 %v25
  %v106 = vpop.f32.mrb[0].mxu0
  %v107 = vadd.f32 0.0, %v106
  %v108 = vpop.f32.mrb[0].mxu0
  %109 = vmatprep.mubr.f32.mxu0 0.0
  %110 = vmatmul.mubr.f32.gmra.mrb[0].mxu0 %v28
  %v111 = vpop.f32.mrb[0].mxu0
  %v112 = vadd.f32 0.0, %v111
  %v113 = vpop.f32.mrb[0].mxu0
  %114 = vdwg.mxu0
  %vm115 = vcmask 261120
  %116 = vst.msk [vmem:[%s2] sm:$0xff] %vm115, %v97
  %117 = vst.msk [vmem:[%s2 + $0x8] sm:$0xff] %vm115, %v102
  %118 = vst.msk [vmem:[%s2 + $0x10] sm:$0xff] %vm115, %v107
  %119 = vst.msk [vmem:[%s2 + $0x18] sm:$0xff] %vm115, %v112
  // Predicated region
  $region10: #{ca_forward.6} parent=0 // pred_check
    _
  $region11: #{ca_forward.6} parent=0 // pred_check_branch
    %121 = sbr.rel (0) target = $region13
  $region12: #{ca_forward.6} parent=0 // pred_region
    _
  $region13: #{ca_forward.6} parent=0 // pred_fallthru
    _
  // Predicated region
  $region14: #{ca_forward.6} parent=0 // pred_check
    _
  $region15: #{ca_forward.6} parent=0 // pred_check_branch
    %123 = sbr.rel (0) target = $region17
  $region16: #{ca_forward.6} parent=0 // pred_region
    _
  $region17: #{ca_forward.6} parent=0 // pred_fallthru
    _

// kernel: ca_forward.5
$region0: #{ca_forward.5}
  #allocation0 [shape = 'u32[]', space=smem, size = 0x4, offset = 0x4, fixed_abs, tag = 'smem constant byte address 0x4 - core index']
  #allocation1 [shape = 'u32[144,128]{1,0:T(1,128)}', space=vmem, size = 0x12000, scoped, tag = 'internal scratch']
  %s0 = inlined_call_operand.vmem [shape: f32[32,24], index: 0, kind: input, shape index: {}]
  %s1 = inlined_call_operand.vmem [shape: f32[24,32], index: 1, kind: input, shape index: {}]
  %s2 = inlined_call_operand.vmem [shape: f32[32,32], index: 2, kind: output, shape index: {}]
  %s3 = sld [smem:[#allocation0]]
  $region18: #{ca_forward.5} parent=0
    _
  %s5 = ssub.s32 1, %s3
  %s6 = scalar_select 0, %s5, %s3
  // Predicated region
  $region2: #{ca_forward.5} parent=0 // pred_check
    _
  $region3: #{ca_forward.5} parent=0 // pred_check_branch
    %8 = sbr.rel (0) target = $region5
  $region4: #{ca_forward.5} parent=0 // pred_region
    _
  $region5: #{ca_forward.5} parent=0 // pred_fallthru
    _
  // Predicated region
  $region6: #{ca_forward.5} parent=0 // pred_check
    _
  $region7: #{ca_forward.5} parent=0 // pred_check_branch
    %10 = sbr.rel (0) target = $region9
  $region8: #{ca_forward.5} parent=0 // pred_region
    _
  $region9: #{ca_forward.5} parent=0 // pred_fallthru
    _
  %v11 = vld [vmem:[%s0] sm:$0xff]
  %v12 = vld [vmem:[%s0 + $0x8] sm:$0xff]
  %v13 = vld [vmem:[%s0 + $0x10] sm:$0xff]
  %v14 = vld [vmem:[%s0 + $0x18] sm:$0xff]
  %v15 = vld [vmem:[%s1] sm:$0xff]
  %v16 = vld [vmem:[%s1 + $0x8] sm:$0xff]
  %v17 = vld [vmem:[%s1 + $0x10] sm:$0xff]
  %vm18 = vcmask 195584
  %v20 = vsel %vm18, %v11, 0
  %v23 = vsel %vm18, %v12, 0
  %v26 = vsel %vm18, %v13, 0
  %v29 = vsel %vm18, %v14, 0
  %31 = vmatprep.subr.mxu0 0.0
  %32 = vmatpush1.msra.mxu0 %v15
  %33 = vmatprep.subr.mxu0 0.0
  %34 = vmatpush1.msra.mxu0 %v16
  %35 = vmatprep.subr.mxu0 0.0
  %36 = vmatpush1.msra.mxu0 %v17
  %37 = vmatprep.subr.mxu0 0.0
  %38 = vmatpush1.msra.mxu0 0.0
  %39 = vmatprep.subr.mxu0 0.0
  %40 = vmatpush1.msra.mxu0 0.0
  %41 = vmatprep.subr.mxu0 0.0
  %42 = vmatpush1.msra.mxu0 0.0
  %43 = vmatprep.subr.mxu0 0.0
  %44 = vmatpush1.msra.mxu0 0.0
  %45 = vmatprep.subr.mxu0 0.0
  %46 = vmatpush1.msra.mxu0 0.0
  %47 = vmatprep.subr.mxu0 0.0
  %48 = vmatpush1.msra.mxu0 0.0
  %49 = vmatprep.subr.mxu0 0.0
  %50 = vmatpush1.msra.mxu0 0.0
  %51 = vmatprep.subr.mxu0 0.0
  %52 = vmatpush1.msra.mxu0 0.0
  %53 = vmatprep.subr.mxu0 0.0
  %54 = vmatpush1.msra.mxu0 0.0
  %55 = vmatprep.subr.mxu0 0.0
  %56 = vmatpush1.msra.mxu0 0.0
  %57 = vmatprep.subr.mxu0 0.0
  %58 = vmatpush1.msra.mxu0 0.0
  %59 = vmatprep.subr.mxu0 0.0
  %60 = vmatpush1.msra.mxu0 0.0
  %61 = vmatprep.subr.mxu0 0.0
  %62 = vmatpush1.msra.mxu0 0.0
  %63 = vmatprep.subr.mxu0 0.0
  %64 = vmatpush1.msra.mxu0 0.0
  %65 = vmatprep.subr.mxu0 0.0
  %66 = vmatpush1.msra.mxu0 0.0
  %67 = vmatprep.subr.mxu0 0.0
  %68 = vmatpush1.msra.mxu0 0.0
  %69 = vmatprep.subr.mxu0 0.0
  %70 = vmatpush1.msra.mxu0 0.0
  %71 = vmatprep.subr.mxu0 0.0
  %72 = vmatpush1.msra.mxu0 0.0
  %73 = vmatprep.subr.mxu0 0.0
  %74 = vmatpush1.msra.mxu0 0.0
  %75 = vmatprep.subr.mxu0 0.0
  %76 = vmatpush1.msra.mxu0 0.0
  %77 = vmatprep.subr.mxu0 0.0
  %78 = vmatpush1.msra.mxu0 0.0
  %79 = vmatprep.subr.mxu0 0.0
  %80 = vmatpush1.msra.mxu0 0.0
  %81 = vmatprep.subr.mxu0 0.0
  %82 = vmatpush1.msra.mxu0 0.0
  %83 = vmatprep.subr.mxu0 0.0
  %84 = vmatpush1.msra.mxu0 0.0
  %85 = vmatprep.subr.mxu0 0.0
  %86 = vmatpush1.msra.mxu0 0.0
  %87 = vmatprep.subr.mxu0 0.0
  %88 = vmatpush1.msra.mxu0 0.0
  %89 = vmatprep.subr.mxu0 0.0
  %90 = vmatpush1.msra.mxu0 0.0
  %91 = vmatprep.subr.mxu0 0.0
  %92 = vmatpush1.msra.mxu0 0.0
  %93 = vmatprep.subr.mxu0 0.0
  %94 = vmatpush1.msra.mxu0 0.0
  %95 = vmatprep.mubr.f32.mxu0 0.0
  %96 = vmatmul.mubr.f32.gmra.mrb[0].mxu0 %v20
  %v97 = vpop.f32.mrb[0].mxu0
  %v98 = vadd.f32 0.0, %v97
  %v99 = vpop.f32.mrb[0].mxu0
  %100 = vmatprep.mubr.f32.mxu0 0.0
  %101 = vmatmul.mubr.f32.gmra.mrb[0].mxu0 %v23
  %v102 = vpop.f32.mrb[0].mxu0
  %v103 = vadd.f32 0.0, %v102
  %v104 = vpop.f32.mrb[0].mxu0
  %105 = vmatprep.mubr.f32.mxu0 0.0
  %106 = vmatmul.mubr.f32.gmra.mrb[0].mxu0 %v26
  %v107 = vpop.f32.mrb[0].mxu0
  %v108 = vadd.f32 0.0, %v107
  %v109 = vpop.f32.mrb[0].mxu0
  %110 = vmatprep.mubr.f32.mxu0 0.0
  %111 = vmatmul.mubr.f32.gmra.mrb[0].mxu0 %v29
  %v112 = vpop.f32.mrb[0].mxu0
  %v113 = vadd.f32 0.0, %v112
  %v114 = vpop.f32.mrb[0].mxu0
  %115 = vdwg.mxu0
  %vm116 = vcmask 261120
  %117 = vst.msk [vmem:[%s2] sm:$0xff] %vm116, %v98
  %118 = vst.msk [vmem:[%s2 + $0x8] sm:$0xff] %vm116, %v103
  %119 = vst.msk [vmem:[%s2 + $0x10] sm:$0xff] %vm116, %v108
  %120 = vst.msk [vmem:[%s2 + $0x18] sm:$0xff] %vm116, %v113
  // Predicated region
  $region10: #{ca_forward.5} parent=0 // pred_check
    _
  $region11: #{ca_forward.5} parent=0 // pred_check_branch
    %122 = sbr.rel (0) target = $region13
  $region12: #{ca_forward.5} parent=0 // pred_region
    _
  $region13: #{ca_forward.5} parent=0 // pred_fallthru
    _
  // Predicated region
  $region14: #{ca_forward.5} parent=0 // pred_check
    _
  $region15: #{ca_forward.5} parent=0 // pred_check_branch
    %124 = sbr.rel (0) target = $region17
  $region16: #{ca_forward.5} parent=0 // pred_region
    _
  $region17: #{ca_forward.5} parent=0 // pred_fallthru
    _

// kernel: ca_forward.4
$region0: #{ca_forward.4}
  #allocation0 [shape = 'u32[]', space=smem, size = 0x4, offset = 0x4, fixed_abs, tag = 'smem constant byte address 0x4 - core index']
  #allocation1 [shape = 'u32[144,128]{1,0:T(1,128)}', space=vmem, size = 0x12000, scoped, tag = 'internal scratch']
  %s0 = inlined_call_operand.vmem [shape: f32[16,32], index: 0, kind: input, shape index: {}]
  %s1 = inlined_call_operand.hbm [shape: f32[32,32], index: 1, kind: input, shape index: {}]
  %s2 = inlined_call_operand.vmem [shape: f32[16,32], index: 2, kind: output, shape index: {}]
  %s3 = sld [smem:[#allocation0]]
  $region22: #{ca_forward.4} parent=0
    _
  %s5 = ssub.s32 1, %s3
  %s6 = scalar_select 0, %s5, %s3
  $region1: #{ca_forward.4} parent=0
    #allocation2 [shape = 'u8[16384]{0}', space=vmem, size = 0x4000, scoped, tag = 'input window, operand 1, single buffered']
    #allocation3 [shape = 's32[1]{0}', space=sflag, size = 0x4, scoped, tag = 'scoped memory for ca_forward.4']
    %7 = vsyncpa [#allocation3], 0
    // Predicated region
    $region2: #{ca_forward.4} parent=1 // pred_check
      _
    $region3: #{ca_forward.4} parent=1 // pred_check_branch
      %9 = sbr.rel (0) target = $region5
    $region4: #{ca_forward.4} parent=1 // pred_region
      _
    $region5: #{ca_forward.4} parent=1 // pred_fallthru
      _
    // Predicated region
    $region6: #{ca_forward.4} parent=1 // pred_check
      _
    $region7: #{ca_forward.4} parent=1 // pred_check_branch
      %11 = sbr.rel (0) target = $region9
    $region8: #{ca_forward.4} parent=1 // pred_region
      %s13 = ssub.s32 512, 512
      %14 = vsyncadd [#allocation3], %s13
      %s15 = sshll.u32 [#allocation2], 4
      %s16 = int_to_ptr.vmem [resolvable:$true] %s15
      %21 = dma.hbm_to_vmem [thread:$0]  %s1, 512, %s16, [#allocation3], 128, 128, 8
    $region9: #{ca_forward.4} parent=1 // pred_fallthru
      _
    // Predicated region
    $region10: #{ca_forward.4} parent=1 // pred_check
      _
    $region11: #{ca_forward.4} parent=1 // pred_check_branch
      %23 = sbr.rel (0) target = $region13
    $region12: #{ca_forward.4} parent=1 // pred_region
      %24 = dma.done [#allocation3], 512
    $region13: #{ca_forward.4} parent=1 // pred_fallthru
      _
    %v25 = vld [vmem:[%s0] sm:$0xff]
    %v26 = vld [vmem:[%s0 + $0x8] sm:$0xff]
    %v27 = vld [vmem:[#allocation2] sm:$0xff]
    %v28 = vld [vmem:[#allocation2 + $0x8] sm:$0xff]
    %v29 = vld [vmem:[#allocation2 + $0x10] sm:$0xff]
    %v30 = vld [vmem:[#allocation2 + $0x18] sm:$0xff]
    %vm31 = vcmask 261120
    %v33 = vsel %vm31, %v25, 0
    %v36 = vsel %vm31, %v26, 0
    %38 = vmatprep.subr.mxu0 0.0
    %39 = vmatpush1.msra.mxu0 %v27
    %40 = vmatprep.subr.mxu0 0.0
    %41 = vmatpush1.msra.mxu0 %v28
    %42 = vmatprep.subr.mxu0 0.0
    %43 = vmatpush1.msra.mxu0 %v29
    %44 = vmatprep.subr.mxu0 0.0
    %45 = vmatpush1.msra.mxu0 %v30
    %46 = vmatprep.subr.mxu0 0.0
    %47 = vmatpush1.msra.mxu0 0.0
    %48 = vmatprep.subr.mxu0 0.0
    %49 = vmatpush1.msra.mxu0 0.0
    %50 = vmatprep.subr.mxu0 0.0
    %51 = vmatpush1.msra.mxu0 0.0
    %52 = vmatprep.subr.mxu0 0.0
    %53 = vmatpush1.msra.mxu0 0.0
    %54 = vmatprep.subr.mxu0 0.0
    %55 = vmatpush1.msra.mxu0 0.0
    %56 = vmatprep.subr.mxu0 0.0
    %57 = vmatpush1.msra.mxu0 0.0
    %58 = vmatprep.subr.mxu0 0.0
    %59 = vmatpush1.msra.mxu0 0.0
    %60 = vmatprep.subr.mxu0 0.0
    %61 = vmatpush1.msra.mxu0 0.0
    %62 = vmatprep.subr.mxu0 0.0
    %63 = vmatpush1.msra.mxu0 0.0
    %64 = vmatprep.subr.mxu0 0.0
    %65 = vmatpush1.msra.mxu0 0.0
    %66 = vmatprep.subr.mxu0 0.0
    %67 = vmatpush1.msra.mxu0 0.0
    %68 = vmatprep.subr.mxu0 0.0
    %69 = vmatpush1.msra.mxu0 0.0
    %70 = vmatprep.subr.mxu0 0.0
    %71 = vmatpush1.msra.mxu0 0.0
    %72 = vmatprep.subr.mxu0 0.0
    %73 = vmatpush1.msra.mxu0 0.0
    %74 = vmatprep.subr.mxu0 0.0
    %75 = vmatpush1.msra.mxu0 0.0
    %76 = vmatprep.subr.mxu0 0.0
    %77 = vmatpush1.msra.mxu0 0.0
    %78 = vmatprep.subr.mxu0 0.0
    %79 = vmatpush1.msra.mxu0 0.0
    %80 = vmatprep.subr.mxu0 0.0
    %81 = vmatpush1.msra.mxu0 0.0
    %82 = vmatprep.subr.mxu0 0.0
    %83 = vmatpush1.msra.mxu0 0.0
    %84 = vmatprep.subr.mxu0 0.0
    %85 = vmatpush1.msra.mxu0 0.0
    %86 = vmatprep.subr.mxu0 0.0
    %87 = vmatpush1.msra.mxu0 0.0
    %88 = vmatprep.subr.mxu0 0.0
    %89 = vmatpush1.msra.mxu0 0.0
    %90 = vmatprep.subr.mxu0 0.0
    %91 = vmatpush1.msra.mxu0 0.0
    %92 = vmatprep.subr.mxu0 0.0
    %93 = vmatpush1.msra.mxu0 0.0
    %94 = vmatprep.subr.mxu0 0.0
    %95 = vmatpush1.msra.mxu0 0.0
    %96 = vmatprep.subr.mxu0 0.0
    %97 = vmatpush1.msra.mxu0 0.0
    %98 = vmatprep.subr.mxu0 0.0
    %99 = vmatpush1.msra.mxu0 0.0
    %100 = vmatprep.subr.mxu0 0.0
    %101 = vmatpush1.msra.mxu0 0.0
    %102 = vmatprep.mubr.f32.mxu0 0.0
    %103 = vmatmul.mubr.f32.gmra.mrb[0].mxu0 %v33
    %v104 = vpop.f32.mrb[0].mxu0
    %v105 = vadd.f32 0.0, %v104
    %v106 = vpop.f32.mrb[0].mxu0
    %107 = vmatprep.mubr.f32.mxu0 0.0
    %108 = vmatmul.mubr.f32.gmra.mrb[0].mxu0 %v36
    %v109 = vpop.f32.mrb[0].mxu0
    %v110 = vadd.f32 0.0, %v109
    %v111 = vpop.f32.mrb[0].mxu0
    %112 = vdwg.mxu0
    %v113 = vmul.f32 %v105, 0.25
    %v114 = vmul.f32 %v110, 0.25
    %115 = vst.msk [vmem:[%s2] sm:$0xff] %vm31, %v113
    %116 = vst.msk [vmem:[%s2 + $0x8] sm:$0xff] %vm31, %v114
    // Predicated region
    $region14: #{ca_forward.4} parent=1 // pred_check
      _
    $region15: #{ca_forward.4} parent=1 // pred_check_branch
      %118 = sbr.rel (0) target = $region17
    $region16: #{ca_forward.4} parent=1 // pred_region
      _
    $region17: #{ca_forward.4} parent=1 // pred_fallthru
      _
    // Predicated region
    $region18: #{ca_forward.4} parent=1 // pred_check
      _
    $region19: #{ca_forward.4} parent=1 // pred_check_branch
      %120 = sbr.rel (0) target = $region21
    $region20: #{ca_forward.4} parent=1 // pred_region
      _
    $region21: #{ca_forward.4} parent=1 // pred_fallthru
      _
    %121 = vsyncpa [#allocation3], 1

// kernel: ca_forward.7
$region0: #{ca_forward.7}
  #allocation0 [shape = 'u32[]', space=smem, size = 0x4, offset = 0x4, fixed_abs, tag = 'smem constant byte address 0x4 - core index']
  #allocation1 [shape = 'u32[144,128]{1,0:T(1,128)}', space=vmem, size = 0x12000, scoped, tag = 'internal scratch']
  #allocation2 [shape = 'f32[2,8,1]{2,1,0:T(8,128)}', space=vmem, size = 0x2000, scoped, tag = 'scratch operand']
  #allocation3 [shape = 'f32[2,8,1]{2,1,0:T(8,128)}', space=vmem, size = 0x2000, scoped, tag = 'scratch operand']
  #allocation4 [shape = 'f32[2,8,16]{2,1,0:T(8,128)}', space=vmem, size = 0x2000, scoped, tag = 'scratch operand']
  %s0 = inlined_call_operand.vmem [shape: f32[2,8,32], index: 0, kind: input, shape index: {}]
  %s1 = inlined_call_operand.vmem [shape: f32[2,16,32], index: 1, kind: input, shape index: {}]
  %s2 = inlined_call_operand.vmem [shape: f32[2,16,32], index: 2, kind: input, shape index: {}]
  %s3 = inlined_call_operand.vmem [shape: f32[32,32], index: 3, kind: input, shape index: {}]
  %s4 = inlined_call_operand.vmem [shape: f32[1,32], index: 4, kind: input, shape index: {}]
  %s5 = inlined_call_operand.hbm [shape: f32[2,8,32], index: 5, kind: output, shape index: {}]
  %s6 = sld [smem:[#allocation0]]
  $region61: #{ca_forward.7} parent=0
    _
  %s8 = ssub.s32 1, %s6
  %s9 = scalar_select 0, %s8, %s6
  $region1: #{ca_forward.7} parent=0
    #allocation5 [shape = 'u8[8192]{0}', space=vmem, size = 0x2000, scoped, tag = 'output window, operand 0']
    #allocation6 [shape = 's32[2]{0}', space=sflag, size = 0x8, scoped, tag = 'scoped memory for ca_forward.7']
    %10 = vsyncpa [#allocation6], 0
    %s11 = scalar_lea.sflag [#allocation6], 1
    %12 = vsyncpa %s11, 0
    loop: start=0, step=1, limit=4
    $region2: #{ca_forward.7} parent=1 // loop_pre_header
      _
    $region3: #{ca_forward.7} parent=1 // loop_header
      %s14 = sphi 0, %s18
      %p15 = scmp.ge.s32.totalorder %s14, 4
      %s21 = sphi 0, %s40
      %s22 = sphi 0, %s36
      %s23 = sphi 0, %s32
      %s24 = sphi 0, %s21
      %s25 = sphi 0, %s22
      %s26 = sphi 0, %s23
      %s27 = sphi 0, %s24
      %s28 = sphi 0, %s25
      %s29 = sphi 0, %s26
      %s45 = sphi 0, %s47
      %s48 = sphi 0, %s45
      %s49 = sphi 0, %s48
      %s65 = sphi 0, %s49
      %s73 = sphi 0, %s75
      %s76 = sphi 0, %s73
      %s77 = sphi 0, %s76
      %s93 = sphi 0, %s77
      %s101 = sphi 0, %s103
      %s104 = sphi 0, %s101
      %s105 = sphi 0, %s104
      %s121 = sphi 0, %s105
      %s125 = sphi 0, %s125
      %s127 = sphi 0, %s125
      %s128 = sphi 0, %s127
      %s142 = sphi 0, %s128
      %s146 = sphi 0, %s146
      %s148 = sphi 0, %s146
      %s149 = sphi 0, %s148
      %s163 = sphi 0, %s149
      %s171 = sphi 0, %s173
      %s174 = sphi 0, %s171
      %s175 = sphi 0, %s174
      %s191 = sphi 0, %s175
    $region4: #{ca_forward.7} parent=1 // loop_header_branch
      %17 = sbr.rel (%p15) target = $region8
    $region5: #{ca_forward.7} parent=1 // loop_body
      %s19 = ssub.s32 %s14, 1
      %s20 = ssub.s32 %s14, 2
      %s30 = sadd.s32 1, %s23
      %p31 = scmp.ge.s32.totalorder %s30, 1
      %s32 = scalar_select %p31, 0, %s30
      %s33 = sadd.s32 1, %s22
      %s34 = scalar_select %p31, %s33, %s22
      %p35 = scmp.ge.s32.totalorder %s34, 1
      %s36 = scalar_select %p35, 0, %s34
      %s37 = sadd.s32 1, %s21
      %s38 = scalar_select %p35, %s37, %s21
      %p39 = scmp.ge.s32.totalorder %s38, 2
      %s40 = scalar_select %p39, 0, %s38
      %s41 = ssub.s32 %s21, %s40
      %s42 = ssub.s32 %s22, %s36
      %s43 = sor.u32 %s41, %s42
      %p44 = scmp.eq.s32.totalorder %s43, 0
      %s46 = sadd.s32 %s45, 1
      %s47 = scalar_select %p44, %s45, %s46
      %p50 = pneg %p44
      %p51 = scmp.eq.s32.totalorder %s14, 1
      %p52 = por %p50, %p51
      %p53 = scmp.ne.s32.totalorder %s45, %s48
      %p54 = scmp.eq.s32.totalorder %s14, 0
      %p55 = por %p53, %p54
      %p56 = scmp.ne.s32.totalorder %s45, %s48
      %p57 = scmp.eq.s32.totalorder %s19, 1
      %p58 = por %p56, %p57
      %p59 = scmp.ne.s32.totalorder %s48, %s49
      %p60 = scmp.eq.s32.totalorder %s19, 0
      %p61 = por %p59, %p60
      %p62 = scmp.ne.s32.totalorder %s48, %s49
      %p63 = scmp.eq.s32.totalorder %s20, 1
      %p64 = por %p62, %p63
      %p66 = scmp.ne.s32.totalorder %s49, %s65
      %p67 = scmp.eq.s32.totalorder %s20, 0
      %p68 = por %p66, %p67
      %s69 = ssub.s32 %s21, %s40
      %s70 = ssub.s32 %s23, %s32
      %s71 = sor.u32 %s69, %s70
      %p72 = scmp.eq.s32.totalorder %s71, 0
      %s74 = sadd.s32 %s73, 1
      %s75 = scalar_select %p72, %s73, %s74
      %p78 = pneg %p72
      %p79 = scmp.eq.s32.totalorder %s14, 1
      %p80 = por %p78, %p79
      %p81 = scmp.ne.s32.totalorder %s73, %s76
      %p82 = scmp.eq.s32.totalorder %s14, 0
      %p83 = por %p81, %p82
      %p84 = scmp.ne.s32.totalorder %s73, %s76
      %p85 = scmp.eq.s32.totalorder %s19, 1
      %p86 = por %p84, %p85
      %p87 = scmp.ne.s32.totalorder %s76, %s77
      %p88 = scmp.eq.s32.totalorder %s19, 0
      %p89 = por %p87, %p88
      %p90 = scmp.ne.s32.totalorder %s76, %s77
      %p91 = scmp.eq.s32.totalorder %s20, 1
      %p92 = por %p90, %p91
      %p94 = scmp.ne.s32.totalorder %s77, %s93
      %p95 = scmp.eq.s32.totalorder %s20, 0
      %p96 = por %p94, %p95
      %s97 = ssub.s32 %s21, %s40
      %s98 = ssub.s32 %s23, %s32
      %s99 = sor.u32 %s97, %s98
      %p100 = scmp.eq.s32.totalorder %s99, 0
      %s102 = sadd.s32 %s101, 1
      %s103 = scalar_select %p100, %s101, %s102
      %p106 = pneg %p100
      %p107 = scmp.eq.s32.totalorder %s14, 1
      %p108 = por %p106, %p107
      %p109 = scmp.ne.s32.totalorder %s101, %s104
      %p110 = scmp.eq.s32.totalorder %s14, 0
      %p111 = por %p109, %p110
      %p112 = scmp.ne.s32.totalorder %s101, %s104
      %p113 = scmp.eq.s32.totalorder %s19, 1
      %p114 = por %p112, %p113
      %p115 = scmp.ne.s32.totalorder %s104, %s105
      %p116 = scmp.eq.s32.totalorder %s19, 0
      %p117 = por %p115, %p116
      %p118 = scmp.ne.s32.totalorder %s104, %s105
      %p119 = scmp.eq.s32.totalorder %s20, 1
      %p120 = por %p118, %p119
      %p122 = scmp.ne.s32.totalorder %s105, %s121
      %p123 = scmp.eq.s32.totalorder %s20, 0
      %p124 = por %p122, %p123
      %s126 = sadd.s32 %s125, 1
      %p129 = scmp.eq.s32.totalorder %s14, 1
      %p130 = scmp.ne.s32.totalorder %s125, %s127
      %p131 = scmp.eq.s32.totalorder %s14, 0
      %p132 = por %p130, %p131
      %p133 = scmp.ne.s32.totalorder %s125, %s127
      %p134 = scmp.eq.s32.totalorder %s19, 1
      %p135 = por %p133, %p134
      %p136 = scmp.ne.s32.totalorder %s127, %s128
      %p137 = scmp.eq.s32.totalorder %s19, 0
      %p138 = por %p136, %p137
      %p139 = scmp.ne.s32.totalorder %s127, %s128
      %p140 = scmp.eq.s32.totalorder %s20, 1
      %p141 = por %p139, %p140
      %p143 = scmp.ne.s32.totalorder %s128, %s142
      %p144 = scmp.eq.s32.totalorder %s20, 0
      %p145 = por %p143, %p144
      %s147 = sadd.s32 %s146, 1
      %p150 = scmp.eq.s32.totalorder %s14, 1
      %p151 = scmp.ne.s32.totalorder %s146, %s148
      %p152 = scmp.eq.s32.totalorder %s14, 0
      %p153 = por %p151, %p152
      %p154 = scmp.ne.s32.totalorder %s146, %s148
      %p155 = scmp.eq.s32.totalorder %s19, 1
      %p156 = por %p154, %p155
      %p157 = scmp.ne.s32.totalorder %s148, %s149
      %p158 = scmp.eq.s32.totalorder %s19, 0
      %p159 = por %p157, %p158
      %p160 = scmp.ne.s32.totalorder %s148, %s149
      %p161 = scmp.eq.s32.totalorder %s20, 1
      %p162 = por %p160, %p161
      %p164 = scmp.ne.s32.totalorder %s149, %s163
      %p165 = scmp.eq.s32.totalorder %s20, 0
      %p166 = por %p164, %p165
      %s167 = ssub.s32 %s21, %s40
      %s168 = ssub.s32 %s22, %s36
      %s169 = sor.u32 %s167, %s168
      %p170 = scmp.eq.s32.totalorder %s169, 0
      %s172 = sadd.s32 %s171, 1
      %s173 = scalar_select %p170, %s171, %s172
      %p176 = pneg %p170
      %p177 = scmp.eq.s32.totalorder %s14, 1
      %p178 = por %p176, %p177
      %p179 = scmp.ne.s32.totalorder %s171, %s174
      %p180 = scmp.eq.s32.totalorder %s14, 0
      %p181 = por %p179, %p180
      %p182 = scmp.ne.s32.totalorder %s171, %s174
      %p183 = scmp.eq.s32.totalorder %s19, 1
      %p184 = por %p182, %p183
      %p185 = scmp.ne.s32.totalorder %s174, %s175
      %p186 = scmp.eq.s32.totalorder %s19, 0
      %p187 = por %p185, %p186
      %p188 = scmp.ne.s32.totalorder %s174, %s175
      %p189 = scmp.eq.s32.totalorder %s20, 1
      %p190 = por %p188, %p189
      %p192 = scmp.ne.s32.totalorder %s175, %s191
      %p193 = scmp.eq.s32.totalorder %s20, 0
      %p194 = por %p192, %p193
      %p195 = scmp.le.s32.totalorder 1, %s14
      %p196 = scmp.lt.s32.totalorder %s14, 3
      %p197 = pnand %p195, %p196
      %p198 = pneg %p197
      // Predicated region
      $region9: #{ca_forward.7} parent=5 // pred_check
        _
      $region10: #{ca_forward.7} parent=5 // pred_check_branch
        %200 = sbr.rel (%p197) target = $region12
      $region11: #{ca_forward.7} parent=5 // pred_region
        %s201 = ssub.s32 %s14, 1
        // Predicated region
        $region13: #{ca_forward.7} parent=11 // pred_check
          %p202 = pneg %p138
        $region14: #{ca_forward.7} parent=11 // pred_check_branch
          %204 = sbr.rel (%p202) target = $region16
        $region15: #{ca_forward.7} parent=11 // pred_region
          _
        $region16: #{ca_forward.7} parent=11 // pred_fallthru
          _
        // Predicated region
        $region17: #{ca_forward.7} parent=11 // pred_check
          %p205 = pneg %p159
        $region18: #{ca_forward.7} parent=11 // pred_check_branch
          %207 = sbr.rel (%p205) target = $region20
        $region19: #{ca_forward.7} parent=11 // pred_region
          _
        $region20: #{ca_forward.7} parent=11 // pred_fallthru
          _
      $region12: #{ca_forward.7} parent=5 // pred_fallthru
        _
      %p208 = scmp.lt.s32.totalorder %s14, 2
      // Predicated region
      $region21: #{ca_forward.7} parent=5 // pred_check
        %p209 = pneg %p208
      $region22: #{ca_forward.7} parent=5 // pred_check_branch
        %211 = sbr.rel (%p209) target = $region24
      $region23: #{ca_forward.7} parent=5 // pred_region
        // Predicated region
        $region25: #{ca_forward.7} parent=23 // pred_check
          %p212 = pneg %p55
        $region26: #{ca_forward.7} parent=23 // pred_check_branch
          %214 = sbr.rel (%p212) target = $region28
        $region27: #{ca_forward.7} parent=23 // pred_region
          %p215 = scmp.lt.s32.totalorder %s21, 1
          %s216 = scalar_select %p215, %s21, 1
          %p217 = scmp.lt.s32.totalorder %s22, 0
          %s218 = scalar_select %p217, %s22, 0
          %s219 = sadd.s32 %s218, %s216
          %s220 = smul.addr %s219, 8
          %s221 = scalar_lea.vmem %s0, %s220
        $region28: #{ca_forward.7} parent=23 // pred_fallthru
          _
        // Predicated region
        $region29: #{ca_forward.7} parent=23 // pred_check
          %p222 = pneg %p83
        $region30: #{ca_forward.7} parent=23 // pred_check_branch
          %224 = sbr.rel (%p222) target = $region32
        $region31: #{ca_forward.7} parent=23 // pred_region
          %s225 = smul.u32 2, %s23
          %p226 = scmp.lt.s32.totalorder %s21, 1
          %s227 = scalar_select %p226, %s21, 1
          %p228 = scmp.lt.s32.totalorder %s225, 1
          %s229 = scalar_select %p228, %s225, 1
          %s230 = smul.addr %s227, 2
          %s231 = sadd.s32 %s229, %s230
          %s232 = smul.addr %s231, 8
          %s233 = scalar_lea.vmem %s1, %s232
          %s234 = smul.u32 2, %s23
        $region32: #{ca_forward.7} parent=23 // pred_fallthru
          _
        // Predicated region
        $region33: #{ca_forward.7} parent=23 // pred_check
          %p235 = pneg %p111
        $region34: #{ca_forward.7} parent=23 // pred_check_branch
          %237 = sbr.rel (%p235) target = $region36
        $region35: #{ca_forward.7} parent=23 // pred_region
          %s238 = smul.u32 2, %s23
          %p239 = scmp.lt.s32.totalorder %s21, 1
          %s240 = scalar_select %p239, %s21, 1
          %p241 = scmp.lt.s32.totalorder %s238, 1
          %s242 = scalar_select %p241, %s238, 1
          %s243 = smul.addr %s240, 2
          %s244 = sadd.s32 %s242, %s243
          %s245 = smul.addr %s244, 8
          %s246 = scalar_lea.vmem %s2, %s245
          %s247 = smul.u32 2, %s23
        $region36: #{ca_forward.7} parent=23 // pred_fallthru
          _
      $region24: #{ca_forward.7} parent=5 // pred_fallthru
        _
      %p248 = scmp.le.s32.totalorder 1, %s14
      %p249 = scmp.lt.s32.totalorder %s14, 3
      %p250 = pnand %p248, %p249
      %p251 = pneg %p250
      // Predicated region
      $region37: #{ca_forward.7} parent=5 // pred_check
        _
      $region38: #{ca_forward.7} parent=5 // pred_check_branch
        %253 = sbr.rel (%p250) target = $region40
      $region39: #{ca_forward.7} parent=5 // pred_region
        %s254 = ssub.s32 %s14, 1
        %p255 = scmp.lt.s32.totalorder %s24, 1
        %s256 = scalar_select %p255, %s24, 1
        %p257 = scmp.lt.s32.totalorder %s25, 0
        %s258 = scalar_select %p257, %s25, 0
        %s259 = sadd.s32 %s258, %s256
        %s260 = smul.addr %s259, 8
        %s261 = scalar_lea.vmem %s0, %s260
        %p262 = pneg %p61
        %p263 = pneg %p58
        %s264 = smul.u32 2, %s26
        %p265 = scmp.lt.s32.totalorder %s24, 1
        %s266 = scalar_select %p265, %s24, 1
        %p267 = scmp.lt.s32.totalorder %s264, 1
        %s268 = scalar_select %p267, %s264, 1
        %s269 = smul.addr %s266, 2
        %s270 = sadd.s32 %s268, %s269
        %s271 = smul.addr %s270, 8
        %s272 = scalar_lea.vmem %s1, %s271
        %p273 = pneg %p89
        %p274 = pneg %p86
        %s275 = smul.u32 2, %s26
        %p276 = scmp.lt.s32.totalorder %s24, 1
        %s277 = scalar_select %p276, %s24, 1
        %p278 = scmp.lt.s32.totalorder %s275, 1
        %s279 = scalar_select %p278, %s275, 1
        %s280 = smul.addr %s277, 2
        %s281 = sadd.s32 %s279, %s280
        %s282 = smul.addr %s281, 8
        %s283 = scalar_lea.vmem %s2, %s282
        %p284 = pneg %p117
        %p285 = pneg %p114
        %p286 = pneg %p138
        %p287 = pneg %p135
        %p288 = pneg %p159
        %p289 = pneg %p156
        %p290 = pneg %p187
        %p291 = pneg %p184
        %s292 = sand.u32 %s174, 1
        %s293 = scalar_lea.sflag [#allocation6], %s292
        %s294 = sand.u32 %s174, 1
        %s295 = smul.addr %s294, 8
        %s296 = scalar_lea.vmem [#allocation5], %s295
        %p297 = scmp.lt.s32.totalorder %s24, 1
        %s298 = scalar_select %p297, %s24, 1
        %p299 = scmp.lt.s32.totalorder %s25, 0
        %s300 = scalar_select %p299, %s25, 0
        %s301 = sadd.s32 %s300, %s298
        %s302 = smul.addr %s301, 8
        %s303 = scalar_lea.vmem %s0, %s302
        %s304 = smul.u32 2, %s26
        %p305 = scmp.lt.s32.totalorder %s24, 1
        %s306 = scalar_select %p305, %s24, 1
        %p307 = scmp.lt.s32.totalorder %s304, 1
        %s308 = scalar_select %p307, %s304, 1
        %s309 = smul.addr %s306, 2
        %s310 = sadd.s32 %s308, %s309
        %s311 = smul.addr %s310, 8
        %s312 = scalar_lea.vmem %s1, %s311
        %s313 = smul.u32 2, %s26
        %s314 = smul.u32 2, %s26
        %p315 = scmp.lt.s32.totalorder %s24, 1
        %s316 = scalar_select %p315, %s24, 1
        %p317 = scmp.lt.s32.totalorder %s314, 1
        %s318 = scalar_select %p317, %s314, 1
        %s319 = smul.addr %s316, 2
        %s320 = sadd.s32 %s318, %s319
        %s321 = smul.addr %s320, 8
        %s322 = scalar_lea.vmem %s2, %s321
        %s323 = smul.u32 2, %s26
        %p324 = scmp.eq.s32.totalorder %s26, 0
        // Predicated region
        $region41: #{ca_forward.7} parent=39 // pred_check
          %p325 = pneg %p324
        $region42: #{ca_forward.7} parent=39 // pred_check_branch
          %327 = sbr.rel (%p325) target = $region44
        $region43: #{ca_forward.7} parent=39 // pred_region
          %vm328 = vcmask 7168
          %329 = vst.msk [vmem:[#allocation2] sm:$0xff] %vm328, -inf
          %330 = vst.msk [vmem:[#allocation2 + $0x8] sm:$0xff] %vm328, -inf
          %331 = vst.msk [vmem:[#allocation3] sm:$0xff] %vm328, 0.0
          %332 = vst.msk [vmem:[#allocation3 + $0x8] sm:$0xff] %vm328, 0.0
          %vm333 = vcmask 130048
          %334 = vst.msk [vmem:[#allocation4] sm:$0xff] %vm333, 0.0
          %335 = vst.msk [vmem:[#allocation4 + $0x8] sm:$0xff] %vm333, 0.0
        $region44: #{ca_forward.7} parent=39 // pred_fallthru
          _
        %v336 = vld [vmem:[%s303] sm:$0xff]
        %v337 = vld [vmem:[%s312] sm:$0xff]
        %v338 = vld [vmem:[%s312 + $0x8] sm:$0xff]
        %v339 = vld [vmem:[%s322] sm:$0xff]
        %v340 = vld [vmem:[%s322 + $0x8] sm:$0xff]
        %vm341 = vcmask 130048
        %v343 = vsel %vm341, %v336, 0
        %v346 = vsel %vm341, %v337, 0
        %v349 = vsel %vm341, %v338, 0
        %351 = vmatprep.subr.mxu0 0.0
        %352 = vmatpush1.xpose.msra.mxu0 %v346
        %353 = vmatprep.subr.mxu0 0.0
        %354 = vmatpush1.xpose.msra.mxu0 %v349
        %355 = vmatprep.subr.mxu0 0.0
        %356 = vmatpush1.xpose.msra.mxu0 0.0
        %357 = vmatprep.subr.mxu0 0.0
        %358 = vmatpush1.xpose.msra.mxu0 0.0
        %359 = vmatprep.subr.mxu0 0.0
        %360 = vmatpush1.xpose.msra.mxu0 0.0
        %361 = vmatprep.subr.mxu0 0.0
        %362 = vmatpush1.xpose.msra.mxu0 0.0
        %363 = vmatprep.subr.mxu0 0.0
        %364 = vmatpush1.xpose.msra.mxu0 0.0
        %365 = vmatprep.subr.mxu0 0.0
        %366 = vmatpush1.xpose.msra.mxu0 0.0
        %367 = vmatprep.subr.mxu0 0.0
        %368 = vmatpush1.xpose.msra.mxu0 0.0
        %369 = vmatprep.subr.mxu0 0.0
        %370 = vmatpush1.xpose.msra.mxu0 0.0
        %371 = vmatprep.subr.mxu0 0.0
        %372 = vmatpush1.xpose.msra.mxu0 0.0
        %373 = vmatprep.subr.mxu0 0.0
        %374 = vmatpush1.xpose.msra.mxu0 0.0
        %375 = vmatprep.subr.mxu0 0.0
        %376 = vmatpush1.xpose.msra.mxu0 0.0
        %377 = vmatprep.subr.mxu0 0.0
        %378 = vmatpush1.xpose.msra.mxu0 0.0
        %379 = vmatprep.subr.mxu0 0.0
        %380 = vmatpush1.xpose.msra.mxu0 0.0
        %381 = vmatprep.subr.mxu0 0.0
        %382 = vmatpush1.xpose.msra.mxu0 0.0
        %383 = vmatprep.subr.mxu0 0.0
        %384 = vmatpush1.xpose.msra.mxu0 0.0
        %385 = vmatprep.subr.mxu0 0.0
        %386 = vmatpush1.xpose.msra.mxu0 0.0
        %387 = vmatprep.subr.mxu0 0.0
        %388 = vmatpush1.xpose.msra.mxu0 0.0
        %389 = vmatprep.subr.mxu0 0.0
        %390 = vmatpush1.xpose.msra.mxu0 0.0
        %391 = vmatprep.subr.mxu0 0.0
        %392 = vmatpush1.xpose.msra.mxu0 0.0
        %393 = vmatprep.subr.mxu0 0.0
        %394 = vmatpush1.xpose.msra.mxu0 0.0
        %395 = vmatprep.subr.mxu0 0.0
        %396 = vmatpush1.xpose.msra.mxu0 0.0
        %397 = vmatprep.subr.mxu0 0.0
        %398 = vmatpush1.xpose.msra.mxu0 0.0
        %399 = vmatprep.subr.mxu0 0.0
        %400 = vmatpush1.xpose.msra.mxu0 0.0
        %401 = vmatprep.subr.mxu0 0.0
        %402 = vmatpush1.xpose.msra.mxu0 0.0
        %403 = vmatprep.subr.mxu0 0.0
        %404 = vmatpush1.xpose.msra.mxu0 0.0
        %405 = vmatprep.subr.mxu0 0.0
        %406 = vmatpush1.xpose.msra.mxu0 0.0
        %407 = vmatprep.subr.mxu0 0.0
        %408 = vmatpush1.xpose.msra.mxu0 0.0
        %409 = vmatprep.subr.mxu0 0.0
        %410 = vmatpush1.xpose.msra.mxu0 0.0
        %411 = vmatprep.subr.mxu0 0.0
        %412 = vmatpush1.xpose.msra.mxu0 0.0
        %413 = vmatprep.subr.mxu0 0.0
        %414 = vmatpush1.xpose.msra.mxu0 0.0
        %415 = vmatprep.mubr.f32.mxu0 0.0
        %416 = vmatmul.mubr.f32.gmra.mrb[0].mxu0 %v343
        %v417 = vpop.f32.mrb[0].mxu0
        %v418 = vadd.f32 0.0, %v417
        %v419 = vpop.f32.mrb[0].mxu0
        %420 = vdwg.mxu0
        %v421 = vld [vmem:[#allocation2] sm:$0xff]
        %v422 = vsel %vm341, %v418, -inf
        %423 = vmax.xlane.f32.xlu0 %v422
        %v424 = vpop.xlane.xlu0 %423
        %v425 = vmax.f32 %v421, %v424
        %v426 = vsub.f32 %v421, %v425
        %v427 = vmul.f32 %v426, 1.442695
        %v428 = vpow.pop %v427
        %430 = vset.pattern.permute.xlu0 0
        %431 = vperm.xlu0 %430, %v425
        %v432 = vpop.permute.xlu0 %431
        %v434 = vsub.f32 %v418, %v432
        %v435 = vmul.f32 %v434, 1.442695
        %v436 = vpow.pop %v435
        %v437 = vld [vmem:[#allocation3] sm:$0xff]
        %v438 = vmul.f32 %v428, %v437
        %v439 = vsel %vm341, %v436, 0.0
        %440 = vadd.xlane.f32.xlu0 %v439
        %v441 = vpop.xlane.xlu0 %440
        %v442 = vadd.f32 %v438, %v441
        %vm443 = vcmask 7168
        %444 = vst.msk [vmem:[#allocation3] sm:$0xff] %vm443, %v442
        %v445 = vld [vmem:[#allocation4] sm:$0xff]
        %447 = vset.pattern.permute.xlu0 0
        %448 = vperm.xlu0 %447, %v428
        %v449 = vpop.permute.xlu0 %448
        %v451 = vmul.f32 %v449, %v445
        %v453 = vsel %vm341, %v436, 0
        %455 = vmatprep.subr.mxu0 0.0
        %456 = vmatpush1.msra.mxu0 %v339
        %457 = vmatprep.subr.mxu0 0.0
        %458 = vmatpush1.msra.mxu0 %v340
        %459 = vmatprep.subr.mxu0 0.0
        %460 = vmatpush1.msra.mxu0 0.0
        %461 = vmatprep.subr.mxu0 0.0
        %462 = vmatpush1.msra.mxu0 0.0
        %463 = vmatprep.subr.mxu0 0.0
        %464 = vmatpush1.msra.mxu0 0.0
        %465 = vmatprep.subr.mxu0 0.0
        %466 = vmatpush1.msra.mxu0 0.0
        %467 = vmatprep.subr.mxu0 0.0
        %468 = vmatpush1.msra.mxu0 0.0
        %469 = vmatprep.subr.mxu0 0.0
        %470 = vmatpush1.msra.mxu0 0.0
        %471 = vmatprep.subr.mxu0 0.0
        %472 = vmatpush1.msra.mxu0 0.0
        %473 = vmatprep.subr.mxu0 0.0
        %474 = vmatpush1.msra.mxu0 0.0
        %475 = vmatprep.subr.mxu0 0.0
        %476 = vmatpush1.msra.mxu0 0.0
        %477 = vmatprep.subr.mxu0 0.0
        %478 = vmatpush1.msra.mxu0 0.0
        %479 = vmatprep.subr.mxu0 0.0
        %480 = vmatpush1.msra.mxu0 0.0
        %481 = vmatprep.subr.mxu0 0.0
        %482 = vmatpush1.msra.mxu0 0.0
        %483 = vmatprep.subr.mxu0 0.0
        %484 = vmatpush1.msra.mxu0 0.0
        %485 = vmatprep.subr.mxu0 0.0
        %486 = vmatpush1.msra.mxu0 0.0
        %487 = vmatprep.subr.mxu0 0.0
        %488 = vmatpush1.msra.mxu0 0.0
        %489 = vmatprep.subr.mxu0 0.0
        %490 = vmatpush1.msra.mxu0 0.0
        %491 = vmatprep.subr.mxu0 0.0
        %492 = vmatpush1.msra.mxu0 0.0
        %493 = vmatprep.subr.mxu0 0.0
        %494 = vmatpush1.msra.mxu0 0.0
        %495 = vmatprep.subr.mxu0 0.0
        %496 = vmatpush1.msra.mxu0 0.0
        %497 = vmatprep.subr.mxu0 0.0
        %498 = vmatpush1.msra.mxu0 0.0
        %499 = vmatprep.subr.mxu0 0.0
        %500 = vmatpush1.msra.mxu0 0.0
        %501 = vmatprep.subr.mxu0 0.0
        %502 = vmatpush1.msra.mxu0 0.0
        %503 = vmatprep.subr.mxu0 0.0
        %504 = vmatpush1.msra.mxu0 0.0
        %505 = vmatprep.subr.mxu0 0.0
        %506 = vmatpush1.msra.mxu0 0.0
        %507 = vmatprep.subr.mxu0 0.0
        %508 = vmatpush1.msra.mxu0 0.0
        %509 = vmatprep.subr.mxu0 0.0
        %510 = vmatpush1.msra.mxu0 0.0
        %511 = vmatprep.subr.mxu0 0.0
        %512 = vmatpush1.msra.mxu0 0.0
        %513 = vmatprep.subr.mxu0 0.0
        %514 = vmatpush1.msra.mxu0 0.0
        %515 = vmatprep.subr.mxu0 0.0
        %516 = vmatpush1.msra.mxu0 0.0
        %517 = vmatprep.subr.mxu0 0.0
        %518 = vmatpush1.msra.mxu0 0.0
        %519 = vmatprep.mubr.f32.mxu0 0.0
        %520 = vmatmul.mubr.f32.gmra.mrb[0].mxu0 %v453
        %v521 = vpop.f32.mrb[0].mxu0
        %v522 = vadd.f32 0.0, %v521
        %v523 = vpop.f32.mrb[0].mxu0
        %524 = vdwg.mxu0
        %v525 = vadd.f32 %v451, %v522
        %526 = vst.msk [vmem:[#allocation4] sm:$0xff] %vm341, %v525
        %527 = vst.msk [vmem:[#allocation2] sm:$0xff] %vm443, %v425
        %528 = vrot.lane.b32.xlu0 %v336, 112
        %v529 = vpop.permute.xlu0 %528
        %530 = vrot.lane.b32.xlu0 %v337, 112
        %v531 = vpop.permute.xlu0 %530
        %532 = vrot.lane.b32.xlu0 %v338, 112
        %v533 = vpop.permute.xlu0 %532
        %v534 = vsel %vm341, %v529, 0
        %v536 = vsel %vm341, %v531, 0
        %v538 = vsel %vm341, %v533, 0
        %540 = vmatprep.subr.mxu0 0.0
        %541 = vmatpush1.xpose.msra.mxu0 %v536
        %542 = vmatprep.subr.mxu0 0.0
        %543 = vmatpush1.xpose.msra.mxu0 %v538
        %544 = vmatprep.subr.mxu0 0.0
        %545 = vmatpush1.xpose.msra.mxu0 0.0
        %546 = vmatprep.subr.mxu0 0.0
        %547 = vmatpush1.xpose.msra.mxu0 0.0
        %548 = vmatprep.subr.mxu0 0.0
        %549 = vmatpush1.xpose.msra.mxu0 0.0
        %550 = vmatprep.subr.mxu0 0.0
        %551 = vmatpush1.xpose.msra.mxu0 0.0
        %552 = vmatprep.subr.mxu0 0.0
        %553 = vmatpush1.xpose.msra.mxu0 0.0
        %554 = vmatprep.subr.mxu0 0.0
        %555 = vmatpush1.xpose.msra.mxu0 0.0
        %556 = vmatprep.subr.mxu0 0.0
        %557 = vmatpush1.xpose.msra.mxu0 0.0
        %558 = vmatprep.subr.mxu0 0.0
        %559 = vmatpush1.xpose.msra.mxu0 0.0
        %560 = vmatprep.subr.mxu0 0.0
        %561 = vmatpush1.xpose.msra.mxu0 0.0
        %562 = vmatprep.subr.mxu0 0.0
        %563 = vmatpush1.xpose.msra.mxu0 0.0
        %564 = vmatprep.subr.mxu0 0.0
        %565 = vmatpush1.xpose.msra.mxu0 0.0
        %566 = vmatprep.subr.mxu0 0.0
        %567 = vmatpush1.xpose.msra.mxu0 0.0
        %568 = vmatprep.subr.mxu0 0.0
        %569 = vmatpush1.xpose.msra.mxu0 0.0
        %570 = vmatprep.subr.mxu0 0.0
        %571 = vmatpush1.xpose.msra.mxu0 0.0
        %572 = vmatprep.subr.mxu0 0.0
        %573 = vmatpush1.xpose.msra.mxu0 0.0
        %574 = vmatprep.subr.mxu0 0.0
        %575 = vmatpush1.xpose.msra.mxu0 0.0
        %576 = vmatprep.subr.mxu0 0.0
        %577 = vmatpush1.xpose.msra.mxu0 0.0
        %578 = vmatprep.subr.mxu0 0.0
        %579 = vmatpush1.xpose.msra.mxu0 0.0
        %580 = vmatprep.subr.mxu0 0.0
        %581 = vmatpush1.xpose.msra.mxu0 0.0
        %582 = vmatprep.subr.mxu0 0.0
        %583 = vmatpush1.xpose.msra.mxu0 0.0
        %584 = vmatprep.subr.mxu0 0.0
        %585 = vmatpush1.xpose.msra.mxu0 0.0
        %586 = vmatprep.subr.mxu0 0.0
        %587 = vmatpush1.xpose.msra.mxu0 0.0
        %588 = vmatprep.subr.mxu0 0.0
        %589 = vmatpush1.xpose.msra.mxu0 0.0
        %590 = vmatprep.subr.mxu0 0.0
        %591 = vmatpush1.xpose.msra.mxu0 0.0
        %592 = vmatprep.subr.mxu0 0.0
        %593 = vmatpush1.xpose.msra.mxu0 0.0
        %594 = vmatprep.subr.mxu0 0.0
        %595 = vmatpush1.xpose.msra.mxu0 0.0
        %596 = vmatprep.subr.mxu0 0.0
        %597 = vmatpush1.xpose.msra.mxu0 0.0
        %598 = vmatprep.subr.mxu0 0.0
        %599 = vmatpush1.xpose.msra.mxu0 0.0
        %600 = vmatprep.subr.mxu0 0.0
        %601 = vmatpush1.xpose.msra.mxu0 0.0
        %602 = vmatprep.subr.mxu0 0.0
        %603 = vmatpush1.xpose.msra.mxu0 0.0
        %604 = vmatprep.mubr.f32.mxu0 0.0
        %605 = vmatmul.mubr.f32.gmra.mrb[0].mxu0 %v534
        %v606 = vpop.f32.mrb[0].mxu0
        %v607 = vadd.f32 0.0, %v606
        %v608 = vpop.f32.mrb[0].mxu0
        %609 = vdwg.mxu0
        %s610 = scalar_lea.vmem [#allocation2], 8
        %v611 = vld [vmem:[%s610] sm:$0xff]
        %v612 = vsel %vm341, %v607, -inf
        %613 = vmax.xlane.f32.xlu0 %v612
        %v614 = vpop.xlane.xlu0 %613
        %v615 = vmax.f32 %v611, %v614
        %v616 = vsub.f32 %v611, %v615
        %v617 = vmul.f32 %v616, 1.442695
        %v618 = vpow.pop %v617
        %620 = vset.pattern.permute.xlu0 0
        %621 = vperm.xlu0 %620, %v615
        %v622 = vpop.permute.xlu0 %621
        %v624 = vsub.f32 %v607, %v622
        %v625 = vmul.f32 %v624, 1.442695
        %v626 = vpow.pop %v625
        %s627 = scalar_lea.vmem [#allocation3], 8
        %v628 = vld [vmem:[%s627] sm:$0xff]
        %v629 = vmul.f32 %v618, %v628
        %v630 = vsel %vm341, %v626, 0.0
        %631 = vadd.xlane.f32.xlu0 %v630
        %v632 = vpop.xlane.xlu0 %631
        %v633 = vadd.f32 %v629, %v632
        %634 = vst.msk [vmem:[%s627] sm:$0xff] %vm443, %v633
        %s635 = scalar_lea.vmem [#allocation4], 8
        %v636 = vld [vmem:[%s635] sm:$0xff]
        %638 = vset.pattern.permute.xlu0 0
        %639 = vperm.xlu0 %638, %v618
        %v640 = vpop.permute.xlu0 %639
        %v642 = vmul.f32 %v640, %v636
        %645 = vrot.lane.b32.xlu0 %v339, 112
        %v646 = vpop.permute.xlu0 %645
        %647 = vrot.lane.b32.xlu0 %v340, 112
        %v648 = vpop.permute.xlu0 %647
        %v652 = vsel %vm341, %v626, 0
        %654 = vmatprep.subr.mxu0 0.0
        %655 = vmatpush1.msra.mxu0 %v646
        %656 = vmatprep.subr.mxu0 0.0
        %657 = vmatpush1.msra.mxu0 %v648
        %658 = vmatprep.subr.mxu0 0.0
        %659 = vmatpush1.msra.mxu0 0.0
        %660 = vmatprep.subr.mxu0 0.0
        %661 = vmatpush1.msra.mxu0 0.0
        %662 = vmatprep.subr.mxu0 0.0
        %663 = vmatpush1.msra.mxu0 0.0
        %664 = vmatprep.subr.mxu0 0.0
        %665 = vmatpush1.msra.mxu0 0.0
        %666 = vmatprep.subr.mxu0 0.0
        %667 = vmatpush1.msra.mxu0 0.0
        %668 = vmatprep.subr.mxu0 0.0
        %669 = vmatpush1.msra.mxu0 0.0
        %670 = vmatprep.subr.mxu0 0.0
        %671 = vmatpush1.msra.mxu0 0.0
        %672 = vmatprep.subr.mxu0 0.0
        %673 = vmatpush1.msra.mxu0 0.0
        %674 = vmatprep.subr.mxu0 0.0
        %675 = vmatpush1.msra.mxu0 0.0
        %676 = vmatprep.subr.mxu0 0.0
        %677 = vmatpush1.msra.mxu0 0.0
        %678 = vmatprep.subr.mxu0 0.0
        %679 = vmatpush1.msra.mxu0 0.0
        %680 = vmatprep.subr.mxu0 0.0
        %681 = vmatpush1.msra.mxu0 0.0
        %682 = vmatprep.subr.mxu0 0.0
        %683 = vmatpush1.msra.mxu0 0.0
        %684 = vmatprep.subr.mxu0 0.0
        %685 = vmatpush1.msra.mxu0 0.0
        %686 = vmatprep.subr.mxu0 0.0
        %687 = vmatpush1.msra.mxu0 0.0
        %688 = vmatprep.subr.mxu0 0.0
        %689 = vmatpush1.msra.mxu0 0.0
        %690 = vmatprep.subr.mxu0 0.0
        %691 = vmatpush1.msra.mxu0 0.0
        %692 = vmatprep.subr.mxu0 0.0
        %693 = vmatpush1.msra.mxu0 0.0
        %694 = vmatprep.subr.mxu0 0.0
        %695 = vmatpush1.msra.mxu0 0.0
        %696 = vmatprep.subr.mxu0 0.0
        %697 = vmatpush1.msra.mxu0 0.0
        %698 = vmatprep.subr.mxu0 0.0
        %699 = vmatpush1.msra.mxu0 0.0
        %700 = vmatprep.subr.mxu0 0.0
        %701 = vmatpush1.msra.mxu0 0.0
        %702 = vmatprep.subr.mxu0 0.0
        %703 = vmatpush1.msra.mxu0 0.0
        %704 = vmatprep.subr.mxu0 0.0
        %705 = vmatpush1.msra.mxu0 0.0
        %706 = vmatprep.subr.mxu0 0.0
        %707 = vmatpush1.msra.mxu0 0.0
        %708 = vmatprep.subr.mxu0 0.0
        %709 = vmatpush1.msra.mxu0 0.0
        %710 = vmatprep.subr.mxu0 0.0
        %711 = vmatpush1.msra.mxu0 0.0
        %712 = vmatprep.subr.mxu0 0.0
        %713 = vmatpush1.msra.mxu0 0.0
        %714 = vmatprep.subr.mxu0 0.0
        %715 = vmatpush1.msra.mxu0 0.0
        %716 = vmatprep.subr.mxu0 0.0
        %717 = vmatpush1.msra.mxu0 0.0
        %718 = vmatprep.mubr.f32.mxu0 0.0
        %719 = vmatmul.mubr.f32.gmra.mrb[0].mxu0 %v652
        %v720 = vpop.f32.mrb[0].mxu0
        %v721 = vadd.f32 0.0, %v720
        %v722 = vpop.f32.mrb[0].mxu0
        %723 = vdwg.mxu0
        %v724 = vadd.f32 %v642, %v721
        %725 = vst.msk [vmem:[%s635] sm:$0xff] %vm341, %v724
        %726 = vst.msk [vmem:[%s610] sm:$0xff] %vm443, %v615
        // Predicated region
        $region45: #{ca_forward.7} parent=39 // pred_check
          %p727 = pneg %p324
        $region46: #{ca_forward.7} parent=39 // pred_check_branch
          %729 = sbr.rel (%p727) target = $region48
        $region47: #{ca_forward.7} parent=39 // pred_region
          %v730 = vld [vmem:[#allocation3] sm:$0xff]
          %v731 = vld [vmem:[#allocation3 + $0x8] sm:$0xff]
          %v732 = vrcp.pop %v730
          %v733 = vrcp.pop %v731
          %v734 = vld [vmem:[#allocation4] sm:$0xff]
          %736 = vset.pattern.permute.xlu0 0
          %737 = vperm.xlu0 %736, %v732
          %v738 = vpop.permute.xlu0 %737
          %v740 = vmul.f32 %v734, %v738
          %v741 = vld [vmem:[%s635] sm:$0xff]
          %743 = vset.pattern.permute.xlu0 0
          %744 = vperm.xlu0 %743, %v733
          %v745 = vpop.permute.xlu0 %744
          %v747 = vmul.f32 %v741, %v745
          %749 = vrot.lane.b32.xlu0 %v747, 16
          %v750 = vpop.permute.xlu0 %749
          %v752 = vsel %vm341, %v740, %v750
          %v753 = vld [vmem:[%s3] sm:$0xff]
          %v754 = vld [vmem:[%s3 + $0x8] sm:$0xff]
          %v755 = vld [vmem:[%s3 + $0x10] sm:$0xff]
          %v756 = vld [vmem:[%s3 + $0x18] sm:$0xff]
          %v757 = vld [vmem:[%s4] sm:$0x1]
          %v759 = vlaneseq
          %v760 = vshrl.u32 %v759, 7
          %v761 = vsub.s32 0, %v760
          %v762 = vrot.slane %v757, %v761
          %vm764 = vcmask 261120
          %v766 = vsel %vm764, %v752, 0
          %768 = vmatprep.subr.mxu0 0.0
          %769 = vmatpush1.msra.mxu0 %v753
          %770 = vmatprep.subr.mxu0 0.0
          %771 = vmatpush1.msra.mxu0 %v754
          %772 = vmatprep.subr.mxu0 0.0
          %773 = vmatpush1.msra.mxu0 %v755
          %774 = vmatprep.subr.mxu0 0.0
          %775 = vmatpush1.msra.mxu0 %v756
          %776 = vmatprep.subr.mxu0 0.0
          %777 = vmatpush1.msra.mxu0 0.0
          %778 = vmatprep.subr.mxu0 0.0
          %779 = vmatpush1.msra.mxu0 0.0
          %780 = vmatprep.subr.mxu0 0.0
          %781 = vmatpush1.msra.mxu0 0.0
          %782 = vmatprep.subr.mxu0 0.0
          %783 = vmatpush1.msra.mxu0 0.0
          %784 = vmatprep.subr.mxu0 0.0
          %785 = vmatpush1.msra.mxu0 0.0
          %786 = vmatprep.subr.mxu0 0.0
          %787 = vmatpush1.msra.mxu0 0.0
          %788 = vmatprep.subr.mxu0 0.0
          %789 = vmatpush1.msra.mxu0 0.0
          %790 = vmatprep.subr.mxu0 0.0
          %791 = vmatpush1.msra.mxu0 0.0
          %792 = vmatprep.subr.mxu0 0.0
          %793 = vmatpush1.msra.mxu0 0.0
          %794 = vmatprep.subr.mxu0 0.0
          %795 = vmatpush1.msra.mxu0 0.0
          %796 = vmatprep.subr.mxu0 0.0
          %797 = vmatpush1.msra.mxu0 0.0
          %798 = vmatprep.subr.mxu0 0.0
          %799 = vmatpush1.msra.mxu0 0.0
          %800 = vmatprep.subr.mxu0 0.0
          %801 = vmatpush1.msra.mxu0 0.0
          %802 = vmatprep.subr.mxu0 0.0
          %803 = vmatpush1.msra.mxu0 0.0
          %804 = vmatprep.subr.mxu0 0.0
          %805 = vmatpush1.msra.mxu0 0.0
          %806 = vmatprep.subr.mxu0 0.0
          %807 = vmatpush1.msra.mxu0 0.0
          %808 = vmatprep.subr.mxu0 0.0
          %809 = vmatpush1.msra.mxu0 0.0
          %810 = vmatprep.subr.mxu0 0.0
          %811 = vmatpush1.msra.mxu0 0.0
          %812 = vmatprep.subr.mxu0 0.0
          %813 = vmatpush1.msra.mxu0 0.0
          %814 = vmatprep.subr.mxu0 0.0
          %815 = vmatpush1.msra.mxu0 0.0
          %816 = vmatprep.subr.mxu0 0.0
          %817 = vmatpush1.msra.mxu0 0.0
          %818 = vmatprep.subr.mxu0 0.0
          %819 = vmatpush1.msra.mxu0 0.0
          %820 = vmatprep.subr.mxu0 0.0
          %821 = vmatpush1.msra.mxu0 0.0
          %822 = vmatprep.subr.mxu0 0.0
          %823 = vmatpush1.msra.mxu0 0.0
          %824 = vmatprep.subr.mxu0 0.0
          %825 = vmatpush1.msra.mxu0 0.0
          %826 = vmatprep.subr.mxu0 0.0
          %827 = vmatpush1.msra.mxu0 0.0
          %828 = vmatprep.subr.mxu0 0.0
          %829 = vmatpush1.msra.mxu0 0.0
          %830 = vmatprep.subr.mxu0 0.0
          %831 = vmatpush1.msra.mxu0 0.0
          %832 = vmatprep.mubr.f32.mxu0 0.0
          %833 = vmatmul.mubr.f32.gmra.mrb[0].mxu0 %v766
          %v834 = vpop.f32.mrb[0].mxu0
          %v835 = vadd.f32 %v762, %v834
          %v836 = vpop.f32.mrb[0].mxu0
          %837 = vdwg.mxu0
          %838 = vst.msk [vmem:[%s296] sm:$0xff] %vm764, %v835
        $region48: #{ca_forward.7} parent=39 // pred_fallthru
          _
        %s839 = sand.u32 %s174, 1
        %s840 = scalar_lea.sflag [#allocation6], %s839
        %s841 = sand.u32 %s174, 1
        %s842 = smul.addr %s841, 8
        %s843 = scalar_lea.vmem [#allocation5], %s842
        // Predicated region
        $region49: #{ca_forward.7} parent=39 // pred_check
          %p844 = pneg %p184
        $region50: #{ca_forward.7} parent=39 // pred_check_branch
          %846 = sbr.rel (%p844) target = $region52
        $region51: #{ca_forward.7} parent=39 // pred_region
          %s848 = ssub.s32 128, 128
          %849 = vsyncadd %s840, %s848
          %s850 = sadd.s32 %s25, %s24
          %s851 = smul.addr %s850, 128
          %s852 = scalar_lea.hbm %s5, %s851
          %s854 = sshll.u32 %s843, 4
          %s855 = int_to_ptr.vmem [resolvable:$true] %s854
          %857 = dma.vmem_to_hbm [thread:$0]  %s855, 128, %s852, %s840
        $region52: #{ca_forward.7} parent=39 // pred_fallthru
          _
      $region40: #{ca_forward.7} parent=5 // pred_fallthru
        _
      %p858 = scmp.le.s32.totalorder 2, %s14
      // Predicated region
      $region53: #{ca_forward.7} parent=5 // pred_check
        %p859 = pneg %p858
      $region54: #{ca_forward.7} parent=5 // pred_check_branch
        %861 = sbr.rel (%p859) target = $region56
      $region55: #{ca_forward.7} parent=5 // pred_region
        %s862 = ssub.s32 %s14, 2
        // Predicated region
        $region57: #{ca_forward.7} parent=55 // pred_check
          %p863 = pneg %p190
        $region58: #{ca_forward.7} parent=55 // pred_check_branch
          %865 = sbr.rel (%p863) target = $region60
        $region59: #{ca_forward.7} parent=55 // pred_region
          %s866 = sand.u32 %s175, 1
          %s867 = scalar_lea.sflag [#allocation6], %s866
          %s868 = sand.u32 %s175, 1
          %s869 = smul.addr %s868, 8
          %s870 = scalar_lea.vmem [#allocation5], %s869
          %871 = dma.done %s867, 128
        $region60: #{ca_forward.7} parent=55 // pred_fallthru
          _
      $region56: #{ca_forward.7} parent=5 // pred_fallthru
        _
    $region6: #{ca_forward.7} parent=1 // loop_footer
      %s18 = sadd.s32 1, %s14
    $region7: #{ca_forward.7} parent=1 // loop_footer_branch
      %13 = sbr.rel target = $region3
    $region8: #{ca_forward.7} parent=1 // loop_exit
      _
    %872 = vsyncpa [#allocation6], 1
    %s873 = scalar_lea.sflag [#allocation6], 1
    %874 = vsyncpa %s873, 1

</llo_original>
